<compile_context>
chip_gen: v6e
topology: v6e:2x2x1
jax: 0.10.0
libtpu: 0.0.40
codegen_flags: <defaults>
</compile_context>

<pallas_src>
import math
import jax
import jax.numpy as jnp
from jax.experimental import pallas as pl
from jax.experimental.pallas import tpu as pltpu

# ----------------------------- config -----------------------------
# Down-sized but structurally faithful roberta-base stand-in:
#   real: H=768, 12 heads (Dh=64), FFN=3072, 12 layers, S<=512
#   here: H=128 (lane-aligned), 2 heads (Dh=64 as in roberta), FFN=256, 2 layers, S=8
VOCAB = 64
MAX_POS = 32
HIDDEN = 128
NUM_HEADS = 2
HEAD_DIM = HIDDEN // NUM_HEADS      # 64 — same head dim as roberta-base
FFN = 256
NUM_LAYERS = 2
LN_EPS = 1e-5
BATCH = 2
SEQ = 8
OUT_PAD = 128                       # classifier output padded to one lane tile


# ----------------------------- fused kernel -----------------------------
def _encoder_kernel(x_ref, mask_ref, eg_ref, eb_ref,
                    wqkv_ref, bqkv_ref, wo_ref, bo_ref, ln1g_ref, ln1b_ref,
                    w1_ref, b1_ref, w2_ref, b2_ref, ln2g_ref, ln2b_ref,
                    poolw_ref, poolb_ref, clsw_ref, clsb_ref,
                    out_ref, x_scr):
    """One (batch-element, layer) grid step.

    grid = (B, NUM_LAYERS).  Activation x is carried in VMEM scratch across the
    layer ("arbitrary") axis; per-layer bf16 weights are streamed/double-buffered
    by the Pallas pipeline.  Pooler + classifier run under pl.when on the last
    layer step.
    """
    l = pl.program_id(1)
    last = pl.num_programs(1) - 1
    scale = 1.0 / math.sqrt(HEAD_DIM)

    def layernorm(h, g, b):
        mu = jnp.mean(h, axis=-1, keepdims=True)
        var = jnp.mean((h - mu) ** 2, axis=-1, keepdims=True)
        return (h - mu) * jax.lax.rsqrt(var + LN_EPS) * g + b

    def gelu(y):
        # tanh-approx GELU (EUP slot); tiny numeric drift vs HF's exact erf GELU.
        return 0.5 * y * (1.0 + jnp.tanh(0.7978845608028654 * (y + 0.044715 * y * y * y)))

    def mm(a_f32, w_bf16):
        # fp32 activations -> bf16 MXU operands, fp32 accumulation.
        return jax.lax.dot_general(a_f32.astype(jnp.bfloat16), w_bf16,
                                   (((1,), (0,)), ((), ())),
                                   preferred_element_type=jnp.float32)

    # Embedding LayerNorm: only on the first layer step of this batch element.
    @pl.when(l == 0)
    def _():
        x_scr[...] = layernorm(x_ref[...], eg_ref[...], eb_ref[...])

    x = x_scr[...]                               # [S, H] fp32, carried across layers
    mask_add = mask_ref[0]                       # [1, S] additive mask (built once in wrapper)

    # ---- self-attention: fused QKV projection, static per-head lane slices ----
    qkv = mm(x, wqkv_ref[0]) + bqkv_ref[0]       # [S, 3H] fp32, stays in vregs/VMEM
    heads = []
    for h in range(NUM_HEADS):                   # short fixed loop (NUM_HEADS=2)
        c = h * HEAD_DIM
        qh = qkv[:, c:c + HEAD_DIM].astype(jnp.bfloat16)
        kh = qkv[:, HIDDEN + c:HIDDEN + c + HEAD_DIM].astype(jnp.bfloat16)
        vh = qkv[:, 2 * HIDDEN + c:2 * HIDDEN + c + HEAD_DIM].astype(jnp.bfloat16)
        # scores contract directly on Dh (no kh.T -> no XLU transpose)
        s = jax.lax.dot_general(qh, kh, (((1,), (1,)), ((), ())),
                                preferred_element_type=jnp.float32) * scale + mask_add
        s = s - jnp.max(s, axis=-1, keepdims=True)
        p = jnp.exp(s)
        p = p * pl.reciprocal(jnp.sum(p, axis=-1, keepdims=True), approx=True)
        heads.append(jnp.dot(p.astype(jnp.bfloat16), vh,
                             preferred_element_type=jnp.float32))
    attn = jnp.concatenate(heads, axis=-1)       # one lane-dense [S, H] slab

    # ---- output projection + residual + LN1 ----
    a = mm(attn, wo_ref[0]) + bo_ref[0]
    x = layernorm(a + x, ln1g_ref[0], ln1b_ref[0])

    # ---- FFN (GELU) + residual + LN2 ----
    f = gelu(mm(x, w1_ref[0]) + b1_ref[0])
    f = mm(f, w2_ref[0]) + b2_ref[0]
    x = layernorm(f + x, ln2g_ref[0], ln2b_ref[0])
    x_scr[...] = x

    # ---- pooler (tanh on [CLS]) + dropout(identity @ eval) + classifier ----
    @pl.when(l == last)
    def _():
        cls = x[0:1, :]                                          # CLS = row 0 of this batch elem
        pooled = jnp.tanh(mm(cls, poolw_ref[...]) + poolb_ref[...])
        # nn.Dropout(0.1): identity at inference (eval mode).
        logits = mm(pooled, clsw_ref[...]) + clsb_ref[...]       # [1, OUT_PAD]; col 0 = logit
        out_ref[...] = logits.reshape(1, 1, OUT_PAD)


# ----------------------------- parameters -----------------------------
def init_params(key):
    def nrm(k, shape, dtype=jnp.bfloat16):
        return (0.02 * jax.random.normal(k, shape)).astype(dtype)

    ks = jax.random.split(key, 8)
    L, H, F = NUM_LAYERS, HIDDEN, FFN
    cls_w = jnp.zeros((H, OUT_PAD), jnp.float32).at[:, 0:1].set(
        0.02 * jax.random.normal(ks[7], (H, 1)))
    return {
        "word_emb": nrm(ks[0], (VOCAB, H), jnp.float32),
        "pos_emb": nrm(ks[1], (MAX_POS, H), jnp.float32),
        "emb_ln_g": jnp.ones((1, H), jnp.float32),
        "emb_ln_b": jnp.zeros((1, H), jnp.float32),
        # Per-layer weights stacked on a leading [L] axis; matmul weights in bf16.
        "wqkv": nrm(ks[2], (L, H, 3 * H)),
        "bqkv": jnp.zeros((L, 1, 3 * H), jnp.float32),
        "wo": nrm(ks[3], (L, H, H)),
        "bo": jnp.zeros((L, 1, H), jnp.float32),
        "ln1_g": jnp.ones((L, 1, H), jnp.float32),
        "ln1_b": jnp.zeros((L, 1, H), jnp.float32),
        "w1": nrm(ks[4], (L, H, F)),
        "b1": jnp.zeros((L, 1, F), jnp.float32),
        "w2": nrm(ks[5], (L, F, H)),
        "b2": jnp.zeros((L, 1, H), jnp.float32),
        "ln2_g": jnp.ones((L, 1, H), jnp.float32),
        "ln2_b": jnp.zeros((L, 1, H), jnp.float32),
        "pool_w": nrm(ks[6], (H, H)),
        "pool_b": jnp.zeros((1, H), jnp.float32),
        "cls_w": cls_w.astype(jnp.bfloat16),      # Linear(H,1) padded to OUT_PAD lanes
        "cls_b": jnp.zeros((1, OUT_PAD), jnp.float32),
    }


# ----------------------------- forward -----------------------------
def bert_classifier_forward(params, input_id, mask):
    """input_id:[B,S] int32 token ids, mask:[B,S] {0,1} attention mask -> [B,1] logit."""
    B, S = input_id.shape
    H = HIDDEN

    # Embedding lookup is a data-dependent gather; kept as XLA glue.
    x_emb = (params["word_emb"][input_id]
             + params["pos_emb"][jnp.arange(S)][None, :, :]).astype(jnp.float32)
    x_emb = x_emb.reshape(B * S, H)

    # Additive attention mask built (and broadcast) once here.
    mask_add = ((1.0 - mask.astype(jnp.float32)) * -1e9).reshape(B, 1, S)

    operands = (
        x_emb, mask_add,
        params["emb_ln_g"], params["emb_ln_b"],
        params["wqkv"], params["bqkv"], params["wo"], params["bo"],
        params["ln1_g"], params["ln1_b"],
        params["w1"], params["b1"], params["w2"], params["b2"],
        params["ln2_g"], params["ln2_b"],
        params["pool_w"], params["pool_b"], params["cls_w"], params["cls_b"],
    )

    def fixed(shape):                                # layer/batch-invariant operand
        if len(shape) == 2:
            return pl.BlockSpec(shape, lambda b, l: (0, 0))
        return pl.BlockSpec(shape, lambda b, l: (0, 0, 0))

    def per_layer(shape):                            # streamed one layer at a time
        return pl.BlockSpec((1,) + tuple(shape[1:]), lambda b, l: (l, 0, 0))

    in_specs = [
        pl.BlockSpec((S, H), lambda b, l: (b, 0)),           # embeddings of batch element b
        pl.BlockSpec((1, 1, S), lambda b, l: (b, 0, 0)),     # additive mask of batch element b
        fixed(params["emb_ln_g"].shape), fixed(params["emb_ln_b"].shape),
        per_layer(params["wqkv"].shape), per_layer(params["bqkv"].shape),
        per_layer(params["wo"].shape), per_layer(params["bo"].shape),
        per_layer(params["ln1_g"].shape), per_layer(params["ln1_b"].shape),
        per_layer(params["w1"].shape), per_layer(params["b1"].shape),
        per_layer(params["w2"].shape), per_layer(params["b2"].shape),
        per_layer(params["ln2_g"].shape), per_layer(params["ln2_b"].shape),
        fixed(params["pool_w"].shape), fixed(params["pool_b"].shape),
        fixed(params["cls_w"].shape), fixed(params["cls_b"].shape),
    ]

    # Advisory cost estimate for XLA scheduling around the fused call.
    flops_layer = (2 * S * H * 3 * H + 4 * NUM_HEADS * S * S * HEAD_DIM
                   + 2 * S * H * H + 4 * S * H * FFN)
    flops = B * (NUM_LAYERS * flops_layer + 2 * H * H + 2 * H * OUT_PAD)
    transcendentals = B * (NUM_LAYERS * (NUM_HEADS * S * S + S * FFN) + H)
    w_bytes = NUM_LAYERS * ((3 * H * H + H * H + 2 * H * FFN) * 2
                            + (3 * H + 5 * H + FFN) * 4)
    bytes_accessed = (B * (S * H * 4 + S * 4 + w_bytes) + B * OUT_PAD * 4
                      + (H * H + H * OUT_PAD) * 2 + (4 * H + OUT_PAD) * 4)

    out = pl.pallas_call(
        _encoder_kernel,
        out_shape=jax.ShapeDtypeStruct((B, 1, OUT_PAD), jnp.float32),
        grid_spec=pltpu.PrefetchScalarGridSpec(
            num_scalar_prefetch=0,
            grid=(B, NUM_LAYERS),
            in_specs=in_specs,
            out_specs=pl.BlockSpec((1, 1, OUT_PAD), lambda b, l: (b, 0, 0)),
            scratch_shapes=[pltpu.VMEM((S, H), jnp.float32)],   # activation carried over layers
        ),
        compiler_params=pltpu.CompilerParams(
            dimension_semantics=(pltpu.PARALLEL, pltpu.ARBITRARY),
            vmem_limit_bytes=32 * 1024 * 1024,
        ),
        cost_estimate=pl.CostEstimate(flops=flops, transcendentals=transcendentals,
                                      bytes_accessed=bytes_accessed),
    )(*operands)

    return out[:, 0, :1]    # [B, 1]: column 0 of the lane-padded classifier output


# ----------------------------- main -----------------------------
if __name__ == "__main__":
    key = jax.random.PRNGKey(0)
    k_param, k_ids = jax.random.split(key)

    params = init_params(k_param)
    input_id = jax.random.randint(k_ids, (BATCH, SEQ), 0, VOCAB, dtype=jnp.int32)
    mask = jnp.array([[1, 1, 1, 1, 1, 1, 1, 1],
                      [1, 1, 1, 1, 1, 1, 0, 0]], dtype=jnp.int32)

    forward = jax.jit(bert_classifier_forward)
    out = jax.block_until_ready(forward(params, input_id, mask))
    assert out.shape == (BATCH, 1) and out.dtype == jnp.float32
    assert bool(jnp.all(jnp.isfinite(out)))
    print("KERNEL_OK")
</pallas_src>

<mosaic_0001>
module attributes {stable_mosaic.version = 11 : i64} {
  func.func @_encoder_kernel(%arg0: i32, %arg1: i32, %arg2: memref<8x128xf32, #tpu.memory_space<vmem>>, %arg3: memref<1x1x8xf32, #tpu.memory_space<vmem>>, %arg4: memref<1x128xf32, #tpu.memory_space<vmem>>, %arg5: memref<1x128xf32, #tpu.memory_space<vmem>>, %arg6: memref<1x128x384xbf16, #tpu.memory_space<vmem>>, %arg7: memref<1x1x384xf32, #tpu.memory_space<vmem>>, %arg8: memref<1x128x128xbf16, #tpu.memory_space<vmem>>, %arg9: memref<1x1x128xf32, #tpu.memory_space<vmem>>, %arg10: memref<1x1x128xf32, #tpu.memory_space<vmem>>, %arg11: memref<1x1x128xf32, #tpu.memory_space<vmem>>, %arg12: memref<1x128x256xbf16, #tpu.memory_space<vmem>>, %arg13: memref<1x1x256xf32, #tpu.memory_space<vmem>>, %arg14: memref<1x256x128xbf16, #tpu.memory_space<vmem>>, %arg15: memref<1x1x128xf32, #tpu.memory_space<vmem>>, %arg16: memref<1x1x128xf32, #tpu.memory_space<vmem>>, %arg17: memref<1x1x128xf32, #tpu.memory_space<vmem>>, %arg18: memref<128x128xbf16, #tpu.memory_space<vmem>>, %arg19: memref<1x128xf32, #tpu.memory_space<vmem>>, %arg20: memref<128x128xbf16, #tpu.memory_space<vmem>>, %arg21: memref<1x128xf32, #tpu.memory_space<vmem>>, %arg22: memref<1x1x128xf32, #tpu.memory_space<vmem>>, %arg23: memref<8x128xf32, #tpu.memory_space<vmem>>) attributes {dimension_semantics = [#tpu.dimension_semantics<parallel>, #tpu.dimension_semantics<arbitrary>], iteration_bounds = array<i64: 2, 2>, scalar_prefetch = 0 : i64, scratch_operands = 1 : i64, tpu.core_type = #tpu.core_type<tc>, window_params = [{transform_indices = @transform_0, window_bounds = array<i64: 8, 128>}, {transform_indices = @transform_1, window_bounds = array<i64: 1, 1, 8>}, {pipeline_mode = #tpu.pipeline_mode<synchronous>, transform_indices = @transform_2, window_bounds = array<i64: 1, 128>}, {pipeline_mode = #tpu.pipeline_mode<synchronous>, transform_indices = @transform_3, window_bounds = array<i64: 1, 128>}, {transform_indices = @transform_4, window_bounds = array<i64: 1, 128, 384>}, {transform_indices = @transform_5, window_bounds = array<i64: 1, 1, 384>}, {transform_indices = @transform_6, window_bounds = array<i64: 1, 128, 128>}, {transform_indices = @transform_7, window_bounds = array<i64: 1, 1, 128>}, {transform_indices = @transform_8, window_bounds = array<i64: 1, 1, 128>}, {transform_indices = @transform_9, window_bounds = array<i64: 1, 1, 128>}, {transform_indices = @transform_10, window_bounds = array<i64: 1, 128, 256>}, {transform_indices = @transform_11, window_bounds = array<i64: 1, 1, 256>}, {transform_indices = @transform_12, window_bounds = array<i64: 1, 256, 128>}, {transform_indices = @transform_13, window_bounds = array<i64: 1, 1, 128>}, {transform_indices = @transform_14, window_bounds = array<i64: 1, 1, 128>}, {transform_indices = @transform_15, window_bounds = array<i64: 1, 1, 128>}, {pipeline_mode = #tpu.pipeline_mode<synchronous>, transform_indices = @transform_16, window_bounds = array<i64: 128, 128>}, {pipeline_mode = #tpu.pipeline_mode<synchronous>, transform_indices = @transform_17, window_bounds = array<i64: 1, 128>}, {pipeline_mode = #tpu.pipeline_mode<synchronous>, transform_indices = @transform_18, window_bounds = array<i64: 128, 128>}, {pipeline_mode = #tpu.pipeline_mode<synchronous>, transform_indices = @transform_19, window_bounds = array<i64: 1, 128>}, {transform_indices = @transform_20, window_bounds = array<i64: 1, 1, 128>}]} {
    %c0_i32 = arith.constant 0 : i32
    %0 = arith.cmpi eq, %arg1, %c0_i32 : i32
    %1 = arith.extui %0 : i1 to i32
    %c0_i32_0 = arith.constant 0 : i32
    %2 = arith.cmpi ne, %1, %c0_i32_0 : i32
    scf.if %2 {
      %c0_71 = arith.constant 0 : index
      %c0_72 = arith.constant 0 : index
      %156 = vector.load %arg2[%c0_71, %c0_72] : memref<8x128xf32, #tpu.memory_space<vmem>>, vector<8x128xf32>
      %c0_73 = arith.constant 0 : index
      %c0_74 = arith.constant 0 : index
      %157 = vector.load %arg4[%c0_73, %c0_74] : memref<1x128xf32, #tpu.memory_space<vmem>>, vector<1x128xf32>
      %c0_75 = arith.constant 0 : index
      %c0_76 = arith.constant 0 : index
      %158 = vector.load %arg5[%c0_75, %c0_76] : memref<1x128xf32, #tpu.memory_space<vmem>>, vector<1x128xf32>
      %cst_77 = arith.constant dense<0.000000e+00> : vector<8xf32>
      %159 = vector.multi_reduction <add>, %156, %cst_77 [1] : vector<8x128xf32> to vector<8xf32>
      %160 = vector.shape_cast %159 : vector<8xf32> to vector<8x1xf32>
      %cst_78 = arith.constant 1.280000e+02 : f32
      %161 = vector.broadcast %cst_78 : f32 to vector<8x1xf32>
      %162 = arith.divf %160, %161 : vector<8x1xf32>
      %163 = vector.broadcast %162 : vector<8x1xf32> to vector<8x128xf32>
      %164 = arith.subf %156, %163 : vector<8x128xf32>
      %165 = arith.mulf %164, %164 : vector<8x128xf32>
      %cst_79 = arith.constant dense<0.000000e+00> : vector<8xf32>
      %166 = vector.multi_reduction <add>, %165, %cst_79 [1] : vector<8x128xf32> to vector<8xf32>
      %167 = vector.shape_cast %166 : vector<8xf32> to vector<8x1xf32>
      %cst_80 = arith.constant 1.280000e+02 : f32
      %168 = vector.broadcast %cst_80 : f32 to vector<8x1xf32>
      %169 = arith.divf %167, %168 : vector<8x1xf32>
      %170 = vector.broadcast %162 : vector<8x1xf32> to vector<8x128xf32>
      %171 = arith.subf %156, %170 : vector<8x128xf32>
      %cst_81 = arith.constant 9.99999974E-6 : f32
      %172 = vector.broadcast %cst_81 : f32 to vector<8x1xf32>
      %173 = arith.addf %169, %172 : vector<8x1xf32>
      %174 = math.rsqrt %173 : vector<8x1xf32>
      %175 = vector.broadcast %174 : vector<8x1xf32> to vector<8x128xf32>
      %176 = arith.mulf %171, %175 : vector<8x128xf32>
      %177 = vector.broadcast %157 : vector<1x128xf32> to vector<8x128xf32>
      %178 = arith.mulf %176, %177 : vector<8x128xf32>
      %179 = vector.broadcast %158 : vector<1x128xf32> to vector<8x128xf32>
      %180 = arith.addf %178, %179 : vector<8x128xf32>
      %c0_82 = arith.constant 0 : index
      %c0_83 = arith.constant 0 : index
      %181 = vector.load %arg23[%c0_82, %c0_83] : memref<8x128xf32, #tpu.memory_space<vmem>>, vector<8x128xf32>
      tpu.vector_store %arg23[%c0_82, %c0_83], %180 {strides = array<i32>} : memref<8x128xf32, #tpu.memory_space<vmem>>, vector<8x128xf32>,
    } else {
    }
    %c0 = arith.constant 0 : index
    %c0_1 = arith.constant 0 : index
    %3 = vector.load %arg23[%c0, %c0_1] : memref<8x128xf32, #tpu.memory_space<vmem>>, vector<8x128xf32>
    %c0_2 = arith.constant 0 : index
    %c0_3 = arith.constant 0 : index
    %c0_4 = arith.constant 0 : index
    %4 = vector.load %arg3[%c0_2, %c0_3, %c0_4] : memref<1x1x8xf32, #tpu.memory_space<vmem>>, vector<1x1x8xf32>
    %5 = vector.shape_cast %4 : vector<1x1x8xf32> to vector<1x8xf32>
    %c0_5 = arith.constant 0 : index
    %c0_6 = arith.constant 0 : index
    %c0_7 = arith.constant 0 : index
    %6 = vector.load %arg6[%c0_5, %c0_6, %c0_7] : memref<1x128x384xbf16, #tpu.memory_space<vmem>>, vector<1x128x384xbf16>
    %7 = vector.shape_cast %6 : vector<1x128x384xbf16> to vector<128x384xbf16>
    %8 = arith.truncf %3 : vector<8x128xf32> to vector<8x128xbf16>
    %cst = arith.constant dense<0.000000e+00> : vector<8x384xf32>
    %9 = tpu.matmul %8, %7, %cst {dimension_numbers = #tpu.dot_dimension_numbers<[1], [0], [0], [1], [0, 0, 1, 1], [], []>} : vector<8x128xbf16>, vector<128x384xbf16>, vector<8x384xf32> -> vector<8x384xf32>
    %c0_8 = arith.constant 0 : index
    %c0_9 = arith.constant 0 : index
    %c0_10 = arith.constant 0 : index
    %10 = vector.load %arg7[%c0_8, %c0_9, %c0_10] : memref<1x1x384xf32, #tpu.memory_space<vmem>>, vector<1x1x384xf32>
    %11 = vector.shape_cast %10 : vector<1x1x384xf32> to vector<1x384xf32>
    %12 = vector.broadcast %11 : vector<1x384xf32> to vector<8x384xf32>
    %13 = arith.addf %9, %12 : vector<8x384xf32>
    %14 = vector.extract_strided_slice %13 {offsets = [0, 0], sizes = [8, 64], strides = [1, 1]} : vector<8x384xf32> to vector<8x64xf32>
    %15 = arith.truncf %14 : vector<8x64xf32> to vector<8x64xbf16>
    %16 = vector.extract_strided_slice %13 {offsets = [0, 128], sizes = [8, 64], strides = [1, 1]} : vector<8x384xf32> to vector<8x64xf32>
    %17 = arith.truncf %16 : vector<8x64xf32> to vector<8x64xbf16>
    %18 = vector.extract_strided_slice %13 {offsets = [0, 256], sizes = [8, 64], strides = [1, 1]} : vector<8x384xf32> to vector<8x64xf32>
    %19 = arith.truncf %18 : vector<8x64xf32> to vector<8x64xbf16>
    %cst_11 = arith.constant dense<0.000000e+00> : vector<8x8xf32>
    %20 = tpu.matmul %15, %17, %cst_11 {dimension_numbers = #tpu.dot_dimension_numbers<[1], [1], [0], [0], [0, 0, 1, 0], [], []>} : vector<8x64xbf16>, vector<8x64xbf16>, vector<8x8xf32> -> vector<8x8xf32>
    %cst_12 = arith.constant 1.250000e-01 : f32
    %21 = vector.broadcast %cst_12 : f32 to vector<8x8xf32>
    %22 = arith.mulf %20, %21 : vector<8x8xf32>
    %23 = vector.broadcast %5 : vector<1x8xf32> to vector<8x8xf32>
    %24 = arith.addf %22, %23 : vector<8x8xf32>
    %cst_13 = arith.constant dense<0xFF800000> : vector<8xf32>
    %25 = vector.multi_reduction <maximumf>, %24, %cst_13 [1] : vector<8x8xf32> to vector<8xf32>
    %26 = vector.shape_cast %25 : vector<8xf32> to vector<8x1xf32>
    %27 = vector.broadcast %26 : vector<8x1xf32> to vector<8x8xf32>
    %28 = arith.subf %24, %27 : vector<8x8xf32>
    %29 = math.exp %28 : vector<8x8xf32>
    %cst_14 = arith.constant dense<0.000000e+00> : vector<8xf32>
    %30 = vector.multi_reduction <add>, %29, %cst_14 [1] : vector<8x8xf32> to vector<8xf32>
    %31 = vector.shape_cast %30 : vector<8xf32> to vector<8x1xf32>
    %32 = tpu.reciprocal %31 {approx = true} : vector<8x1xf32> -> vector<8x1xf32>
    %33 = vector.broadcast %32 : vector<8x1xf32> to vector<8x8xf32>
    %34 = arith.mulf %29, %33 : vector<8x8xf32>
    %35 = arith.truncf %34 : vector<8x8xf32> to vector<8x8xbf16>
    %cst_15 = arith.constant dense<0.000000e+00> : vector<8x64xf32>
    %36 = tpu.matmul %35, %19, %cst_15 {dimension_numbers = #tpu.dot_dimension_numbers<[1], [0], [0], [1], [0, 0, 1, 1], [], []>} : vector<8x8xbf16>, vector<8x64xbf16>, vector<8x64xf32> -> vector<8x64xf32>
    %37 = vector.extract_strided_slice %13 {offsets = [0, 64], sizes = [8, 64], strides = [1, 1]} : vector<8x384xf32> to vector<8x64xf32>
    %38 = arith.truncf %37 : vector<8x64xf32> to vector<8x64xbf16>
    %39 = vector.extract_strided_slice %13 {offsets = [0, 192], sizes = [8, 64], strides = [1, 1]} : vector<8x384xf32> to vector<8x64xf32>
    %40 = arith.truncf %39 : vector<8x64xf32> to vector<8x64xbf16>
    %41 = vector.extract_strided_slice %13 {offsets = [0, 320], sizes = [8, 64], strides = [1, 1]} : vector<8x384xf32> to vector<8x64xf32>
    %42 = arith.truncf %41 : vector<8x64xf32> to vector<8x64xbf16>
    %cst_16 = arith.constant dense<0.000000e+00> : vector<8x8xf32>
    %43 = tpu.matmul %38, %40, %cst_16 {dimension_numbers = #tpu.dot_dimension_numbers<[1], [1], [0], [0], [0, 0, 1, 0], [], []>} : vector<8x64xbf16>, vector<8x64xbf16>, vector<8x8xf32> -> vector<8x8xf32>
    %cst_17 = arith.constant 1.250000e-01 : f32
    %44 = vector.broadcast %cst_17 : f32 to vector<8x8xf32>
    %45 = arith.mulf %43, %44 : vector<8x8xf32>
    %46 = vector.broadcast %5 : vector<1x8xf32> to vector<8x8xf32>
    %47 = arith.addf %45, %46 : vector<8x8xf32>
    %cst_18 = arith.constant dense<0xFF800000> : vector<8xf32>
    %48 = vector.multi_reduction <maximumf>, %47, %cst_18 [1] : vector<8x8xf32> to vector<8xf32>
    %49 = vector.shape_cast %48 : vector<8xf32> to vector<8x1xf32>
    %50 = vector.broadcast %49 : vector<8x1xf32> to vector<8x8xf32>
    %51 = arith.subf %47, %50 : vector<8x8xf32>
    %52 = math.exp %51 : vector<8x8xf32>
    %cst_19 = arith.constant dense<0.000000e+00> : vector<8xf32>
    %53 = vector.multi_reduction <add>, %52, %cst_19 [1] : vector<8x8xf32> to vector<8xf32>
    %54 = vector.shape_cast %53 : vector<8xf32> to vector<8x1xf32>
    %55 = tpu.reciprocal %54 {approx = true} : vector<8x1xf32> -> vector<8x1xf32>
    %56 = vector.broadcast %55 : vector<8x1xf32> to vector<8x8xf32>
    %57 = arith.mulf %52, %56 : vector<8x8xf32>
    %58 = arith.truncf %57 : vector<8x8xf32> to vector<8x8xbf16>
    %cst_20 = arith.constant dense<0.000000e+00> : vector<8x64xf32>
    %59 = tpu.matmul %58, %42, %cst_20 {dimension_numbers = #tpu.dot_dimension_numbers<[1], [0], [0], [1], [0, 0, 1, 1], [], []>} : vector<8x8xbf16>, vector<8x64xbf16>, vector<8x64xf32> -> vector<8x64xf32>
    %60 = tpu.concatenate %36, %59 in 1 : vector<8x64xf32>, vector<8x64xf32> -> vector<8x128xf32>
    %c0_21 = arith.constant 0 : index
    %c0_22 = arith.constant 0 : index
    %c0_23 = arith.constant 0 : index
    %61 = vector.load %arg8[%c0_21, %c0_22, %c0_23] : memref<1x128x128xbf16, #tpu.memory_space<vmem>>, vector<1x128x128xbf16>
    %62 = vector.shape_cast %61 : vector<1x128x128xbf16> to vector<128x128xbf16>
    %63 = arith.truncf %60 : vector<8x128xf32> to vector<8x128xbf16>
    %cst_24 = arith.constant dense<0.000000e+00> : vector<8x128xf32>
    %64 = tpu.matmul %63, %62, %cst_24 {dimension_numbers = #tpu.dot_dimension_numbers<[1], [0], [0], [1], [0, 0, 1, 1], [], []>} : vector<8x128xbf16>, vector<128x128xbf16>, vector<8x128xf32> -> vector<8x128xf32>
    %c0_25 = arith.constant 0 : index
    %c0_26 = arith.constant 0 : index
    %c0_27 = arith.constant 0 : index
    %65 = vector.load %arg9[%c0_25, %c0_26, %c0_27] : memref<1x1x128xf32, #tpu.memory_space<vmem>>, vector<1x1x128xf32>
    %66 = vector.shape_cast %65 : vector<1x1x128xf32> to vector<1x128xf32>
    %67 = vector.broadcast %66 : vector<1x128xf32> to vector<8x128xf32>
    %68 = arith.addf %64, %67 : vector<8x128xf32>
    %69 = arith.addf %68, %3 : vector<8x128xf32>
    %c0_28 = arith.constant 0 : index
    %c0_29 = arith.constant 0 : index
    %c0_30 = arith.constant 0 : index
    %70 = vector.load %arg10[%c0_28, %c0_29, %c0_30] : memref<1x1x128xf32, #tpu.memory_space<vmem>>, vector<1x1x128xf32>
    %71 = vector.shape_cast %70 : vector<1x1x128xf32> to vector<1x128xf32>
    %c0_31 = arith.constant 0 : index
    %c0_32 = arith.constant 0 : index
    %c0_33 = arith.constant 0 : index
    %72 = vector.load %arg11[%c0_31, %c0_32, %c0_33] : memref<1x1x128xf32, #tpu.memory_space<vmem>>, vector<1x1x128xf32>
    %73 = vector.shape_cast %72 : vector<1x1x128xf32> to vector<1x128xf32>
    %cst_34 = arith.constant dense<0.000000e+00> : vector<8xf32>
    %74 = vector.multi_reduction <add>, %69, %cst_34 [1] : vector<8x128xf32> to vector<8xf32>
    %75 = vector.shape_cast %74 : vector<8xf32> to vector<8x1xf32>
    %cst_35 = arith.constant 1.280000e+02 : f32
    %76 = vector.broadcast %cst_35 : f32 to vector<8x1xf32>
    %77 = arith.divf %75, %76 : vector<8x1xf32>
    %78 = vector.broadcast %77 : vector<8x1xf32> to vector<8x128xf32>
    %79 = arith.subf %69, %78 : vector<8x128xf32>
    %80 = arith.mulf %79, %79 : vector<8x128xf32>
    %cst_36 = arith.constant dense<0.000000e+00> : vector<8xf32>
    %81 = vector.multi_reduction <add>, %80, %cst_36 [1] : vector<8x128xf32> to vector<8xf32>
    %82 = vector.shape_cast %81 : vector<8xf32> to vector<8x1xf32>
    %cst_37 = arith.constant 1.280000e+02 : f32
    %83 = vector.broadcast %cst_37 : f32 to vector<8x1xf32>
    %84 = arith.divf %82, %83 : vector<8x1xf32>
    %85 = vector.broadcast %77 : vector<8x1xf32> to vector<8x128xf32>
    %86 = arith.subf %69, %85 : vector<8x128xf32>
    %cst_38 = arith.constant 9.99999974E-6 : f32
    %87 = vector.broadcast %cst_38 : f32 to vector<8x1xf32>
    %88 = arith.addf %84, %87 : vector<8x1xf32>
    %89 = math.rsqrt %88 : vector<8x1xf32>
    %90 = vector.broadcast %89 : vector<8x1xf32> to vector<8x128xf32>
    %91 = arith.mulf %86, %90 : vector<8x128xf32>
    %92 = vector.broadcast %71 : vector<1x128xf32> to vector<8x128xf32>
    %93 = arith.mulf %91, %92 : vector<8x128xf32>
    %94 = vector.broadcast %73 : vector<1x128xf32> to vector<8x128xf32>
    %95 = arith.addf %93, %94 : vector<8x128xf32>
    %c0_39 = arith.constant 0 : index
    %c0_40 = arith.constant 0 : index
    %c0_41 = arith.constant 0 : index
    %96 = vector.load %arg12[%c0_39, %c0_40, %c0_41] : memref<1x128x256xbf16, #tpu.memory_space<vmem>>, vector<1x128x256xbf16>
    %97 = vector.shape_cast %96 : vector<1x128x256xbf16> to vector<128x256xbf16>
    %98 = arith.truncf %95 : vector<8x128xf32> to vector<8x128xbf16>
    %cst_42 = arith.constant dense<0.000000e+00> : vector<8x256xf32>
    %99 = tpu.matmul %98, %97, %cst_42 {dimension_numbers = #tpu.dot_dimension_numbers<[1], [0], [0], [1], [0, 0, 1, 1], [], []>} : vector<8x128xbf16>, vector<128x256xbf16>, vector<8x256xf32> -> vector<8x256xf32>
    %c0_43 = arith.constant 0 : index
    %c0_44 = arith.constant 0 : index
    %c0_45 = arith.constant 0 : index
    %100 = vector.load %arg13[%c0_43, %c0_44, %c0_45] : memref<1x1x256xf32, #tpu.memory_space<vmem>>, vector<1x1x256xf32>
    %101 = vector.shape_cast %100 : vector<1x1x256xf32> to vector<1x256xf32>
    %102 = vector.broadcast %101 : vector<1x256xf32> to vector<8x256xf32>
    %103 = arith.addf %99, %102 : vector<8x256xf32>
    %cst_46 = arith.constant 5.000000e-01 : f32
    %104 = vector.broadcast %cst_46 : f32 to vector<8x256xf32>
    %105 = arith.mulf %104, %103 : vector<8x256xf32>
    %cst_47 = arith.constant 4.471500e-02 : f32
    %106 = vector.broadcast %cst_47 : f32 to vector<8x256xf32>
    %107 = arith.mulf %106, %103 : vector<8x256xf32>
    %108 = arith.mulf %107, %103 : vector<8x256xf32>
    %109 = arith.mulf %108, %103 : vector<8x256xf32>
    %110 = arith.addf %103, %109 : vector<8x256xf32>
    %cst_48 = arith.constant 0.797884583 : f32
    %111 = vector.broadcast %cst_48 : f32 to vector<8x256xf32>
    %112 = arith.mulf %111, %110 : vector<8x256xf32>
    %113 = math.tanh %112 : vector<8x256xf32>
    %cst_49 = arith.constant 1.000000e+00 : f32
    %114 = vector.broadcast %cst_49 : f32 to vector<8x256xf32>
    %115 = arith.addf %114, %113 : vector<8x256xf32>
    %116 = arith.mulf %105, %115 : vector<8x256xf32>
    %c0_50 = arith.constant 0 : index
    %c0_51 = arith.constant 0 : index
    %c0_52 = arith.constant 0 : index
    %117 = vector.load %arg14[%c0_50, %c0_51, %c0_52] : memref<1x256x128xbf16, #tpu.memory_space<vmem>>, vector<1x256x128xbf16>
    %118 = vector.shape_cast %117 : vector<1x256x128xbf16> to vector<256x128xbf16>
    %119 = arith.truncf %116 : vector<8x256xf32> to vector<8x256xbf16>
    %cst_53 = arith.constant dense<0.000000e+00> : vector<8x128xf32>
    %120 = tpu.matmul %119, %118, %cst_53 {dimension_numbers = #tpu.dot_dimension_numbers<[1], [0], [0], [1], [0, 0, 1, 1], [], []>} : vector<8x256xbf16>, vector<256x128xbf16>, vector<8x128xf32> -> vector<8x128xf32>
    %c0_54 = arith.constant 0 : index
    %c0_55 = arith.constant 0 : index
    %c0_56 = arith.constant 0 : index
    %121 = vector.load %arg15[%c0_54, %c0_55, %c0_56] : memref<1x1x128xf32, #tpu.memory_space<vmem>>, vector<1x1x128xf32>
    %122 = vector.shape_cast %121 : vector<1x1x128xf32> to vector<1x128xf32>
    %123 = vector.broadcast %122 : vector<1x128xf32> to vector<8x128xf32>
    %124 = arith.addf %120, %123 : vector<8x128xf32>
    %125 = arith.addf %124, %95 : vector<8x128xf32>
    %c0_57 = arith.constant 0 : index
    %c0_58 = arith.constant 0 : index
    %c0_59 = arith.constant 0 : index
    %126 = vector.load %arg16[%c0_57, %c0_58, %c0_59] : memref<1x1x128xf32, #tpu.memory_space<vmem>>, vector<1x1x128xf32>
    %127 = vector.shape_cast %126 : vector<1x1x128xf32> to vector<1x128xf32>
    %c0_60 = arith.constant 0 : index
    %c0_61 = arith.constant 0 : index
    %c0_62 = arith.constant 0 : index
    %128 = vector.load %arg17[%c0_60, %c0_61, %c0_62] : memref<1x1x128xf32, #tpu.memory_space<vmem>>, vector<1x1x128xf32>
    %129 = vector.shape_cast %128 : vector<1x1x128xf32> to vector<1x128xf32>
    %cst_63 = arith.constant dense<0.000000e+00> : vector<8xf32>
    %130 = vector.multi_reduction <add>, %125, %cst_63 [1] : vector<8x128xf32> to vector<8xf32>
    %131 = vector.shape_cast %130 : vector<8xf32> to vector<8x1xf32>
    %cst_64 = arith.constant 1.280000e+02 : f32
    %132 = vector.broadcast %cst_64 : f32 to vector<8x1xf32>
    %133 = arith.divf %131, %132 : vector<8x1xf32>
    %134 = vector.broadcast %133 : vector<8x1xf32> to vector<8x128xf32>
    %135 = arith.subf %125, %134 : vector<8x128xf32>
    %136 = arith.mulf %135, %135 : vector<8x128xf32>
    %cst_65 = arith.constant dense<0.000000e+00> : vector<8xf32>
    %137 = vector.multi_reduction <add>, %136, %cst_65 [1] : vector<8x128xf32> to vector<8xf32>
    %138 = vector.shape_cast %137 : vector<8xf32> to vector<8x1xf32>
    %cst_66 = arith.constant 1.280000e+02 : f32
    %139 = vector.broadcast %cst_66 : f32 to vector<8x1xf32>
    %140 = arith.divf %138, %139 : vector<8x1xf32>
    %141 = vector.broadcast %133 : vector<8x1xf32> to vector<8x128xf32>
    %142 = arith.subf %125, %141 : vector<8x128xf32>
    %cst_67 = arith.constant 9.99999974E-6 : f32
    %143 = vector.broadcast %cst_67 : f32 to vector<8x1xf32>
    %144 = arith.addf %140, %143 : vector<8x1xf32>
    %145 = math.rsqrt %144 : vector<8x1xf32>
    %146 = vector.broadcast %145 : vector<8x1xf32> to vector<8x128xf32>
    %147 = arith.mulf %142, %146 : vector<8x128xf32>
    %148 = vector.broadcast %127 : vector<1x128xf32> to vector<8x128xf32>
    %149 = arith.mulf %147, %148 : vector<8x128xf32>
    %150 = vector.broadcast %129 : vector<1x128xf32> to vector<8x128xf32>
    %151 = arith.addf %149, %150 : vector<8x128xf32>
    %c0_68 = arith.constant 0 : index
    %c0_69 = arith.constant 0 : index
    %152 = vector.load %arg23[%c0_68, %c0_69] : memref<8x128xf32, #tpu.memory_space<vmem>>, vector<8x128xf32>
    tpu.vector_store %arg23[%c0_68, %c0_69], %151 {strides = array<i32>} : memref<8x128xf32, #tpu.memory_space<vmem>>, vector<8x128xf32>,
    %c1_i32 = arith.constant 1 : i32
    %153 = arith.cmpi eq, %arg1, %c1_i32 : i32
    %154 = arith.extui %153 : i1 to i32
    %c0_i32_70 = arith.constant 0 : i32
    %155 = arith.cmpi ne, %154, %c0_i32_70 : i32
    scf.if %155 {
      %156 = vector.extract_strided_slice %151 {offsets = [0, 0], sizes = [1, 128], strides = [1, 1]} : vector<8x128xf32> to vector<1x128xf32>
      %c0_71 = arith.constant 0 : index
      %c0_72 = arith.constant 0 : index
      %157 = vector.load %arg18[%c0_71, %c0_72] : memref<128x128xbf16, #tpu.memory_space<vmem>>, vector<128x128xbf16>
      %158 = arith.truncf %156 : vector<1x128xf32> to vector<1x128xbf16>
      %cst_73 = arith.constant dense<0.000000e+00> : vector<1x128xf32>
      %159 = tpu.matmul %158, %157, %cst_73 {dimension_numbers = #tpu.dot_dimension_numbers<[1], [0], [0], [1], [0, 0, 1, 1], [], []>} : vector<1x128xbf16>, vector<128x128xbf16>, vector<1x128xf32> -> vector<1x128xf32>
      %c0_74 = arith.constant 0 : index
      %c0_75 = arith.constant 0 : index
      %160 = vector.load %arg19[%c0_74, %c0_75] : memref<1x128xf32, #tpu.memory_space<vmem>>, vector<1x128xf32>
      %161 = arith.addf %159, %160 : vector<1x128xf32>
      %162 = math.tanh %161 : vector<1x128xf32>
      %c0_76 = arith.constant 0 : index
      %c0_77 = arith.constant 0 : index
      %163 = vector.load %arg20[%c0_76, %c0_77] : memref<128x128xbf16, #tpu.memory_space<vmem>>, vector<128x128xbf16>
      %164 = arith.truncf %162 : vector<1x128xf32> to vector<1x128xbf16>
      %cst_78 = arith.constant dense<0.000000e+00> : vector<1x128xf32>
      %165 = tpu.matmul %164, %163, %cst_78 {dimension_numbers = #tpu.dot_dimension_numbers<[1], [0], [0], [1], [0, 0, 1, 1], [], []>} : vector<1x128xbf16>, vector<128x128xbf16>, vector<1x128xf32> -> vector<1x128xf32>
      %c0_79 = arith.constant 0 : index
      %c0_80 = arith.constant 0 : index
      %166 = vector.load %arg21[%c0_79, %c0_80] : memref<1x128xf32, #tpu.memory_space<vmem>>, vector<1x128xf32>
      %167 = arith.addf %165, %166 : vector<1x128xf32>
      %168 = vector.shape_cast %167 : vector<1x128xf32> to vector<1x1x128xf32>
      %c0_81 = arith.constant 0 : index
      %c0_82 = arith.constant 0 : index
      %c0_83 = arith.constant 0 : index
      %169 = vector.load %arg22[%c0_81, %c0_82, %c0_83] : memref<1x1x128xf32, #tpu.memory_space<vmem>>, vector<1x1x128xf32>
      tpu.vector_store %arg22[%c0_81, %c0_82, %c0_83], %168 {strides = array<i32>} : memref<1x1x128xf32, #tpu.memory_space<vmem>>, vector<1x1x128xf32>,
    } else {
    }
    return
  }
  func.func @transform_0(%arg0: i32, %arg1: i32) -> (i32, i32) {
    %c0_i32 = arith.constant 0 : i32
    %c0_i32_0 = arith.constant 0 : i32
    return %arg0, %c0_i32 : i32, i32
  }
  func.func @transform_1(%arg0: i32, %arg1: i32) -> (i32, i32, i32) {
    %c0_i32 = arith.constant 0 : i32
    %c0_i32_0 = arith.constant 0 : i32
    %c0_i32_1 = arith.constant 0 : i32
    return %arg0, %c0_i32, %c0_i32_0 : i32, i32, i32
  }
  func.func @transform_2(%arg0: i32, %arg1: i32) -> (i32, i32) {
    %c0_i32 = arith.constant 0 : i32
    %c0_i32_0 = arith.constant 0 : i32
    %c0_i32_1 = arith.constant 0 : i32
    return %c0_i32, %c0_i32_0 : i32, i32
  }
  func.func @transform_3(%arg0: i32, %arg1: i32) -> (i32, i32) {
    %c0_i32 = arith.constant 0 : i32
    %c0_i32_0 = arith.constant 0 : i32
    %c0_i32_1 = arith.constant 0 : i32
    return %c0_i32, %c0_i32_0 : i32, i32
  }
  func.func @transform_4(%arg0: i32, %arg1: i32) -> (i32, i32, i32) {
    %c0_i32 = arith.constant 0 : i32
    %c0_i32_0 = arith.constant 0 : i32
    %c0_i32_1 = arith.constant 0 : i32
    return %arg1, %c0_i32, %c0_i32_0 : i32, i32, i32
  }
  func.func @transform_5(%arg0: i32, %arg1: i32) -> (i32, i32, i32) {
    %c0_i32 = arith.constant 0 : i32
    %c0_i32_0 = arith.constant 0 : i32
    %c0_i32_1 = arith.constant 0 : i32
    return %arg1, %c0_i32, %c0_i32_0 : i32, i32, i32
  }
  func.func @transform_6(%arg0: i32, %arg1: i32) -> (i32, i32, i32) {
    %c0_i32 = arith.constant 0 : i32
    %c0_i32_0 = arith.constant 0 : i32
    %c0_i32_1 = arith.constant 0 : i32
    return %arg1, %c0_i32, %c0_i32_0 : i32, i32, i32
  }
  func.func @transform_7(%arg0: i32, %arg1: i32) -> (i32, i32, i32) {
    %c0_i32 = arith.constant 0 : i32
    %c0_i32_0 = arith.constant 0 : i32
    %c0_i32_1 = arith.constant 0 : i32
    return %arg1, %c0_i32, %c0_i32_0 : i32, i32, i32
  }
  func.func @transform_8(%arg0: i32, %arg1: i32) -> (i32, i32, i32) {
    %c0_i32 = arith.constant 0 : i32
    %c0_i32_0 = arith.constant 0 : i32
    %c0_i32_1 = arith.constant 0 : i32
    return %arg1, %c0_i32, %c0_i32_0 : i32, i32, i32
  }
  func.func @transform_9(%arg0: i32, %arg1: i32) -> (i32, i32, i32) {
    %c0_i32 = arith.constant 0 : i32
    %c0_i32_0 = arith.constant 0 : i32
    %c0_i32_1 = arith.constant 0 : i32
    return %arg1, %c0_i32, %c0_i32_0 : i32, i32, i32
  }
  func.func @transform_10(%arg0: i32, %arg1: i32) -> (i32, i32, i32) {
    %c0_i32 = arith.constant 0 : i32
    %c0_i32_0 = arith.constant 0 : i32
    %c0_i32_1 = arith.constant 0 : i32
    return %arg1, %c0_i32, %c0_i32_0 : i32, i32, i32
  }
  func.func @transform_11(%arg0: i32, %arg1: i32) -> (i32, i32, i32) {
    %c0_i32 = arith.constant 0 : i32
    %c0_i32_0 = arith.constant 0 : i32
    %c0_i32_1 = arith.constant 0 : i32
    return %arg1, %c0_i32, %c0_i32_0 : i32, i32, i32
  }
  func.func @transform_12(%arg0: i32, %arg1: i32) -> (i32, i32, i32) {
    %c0_i32 = arith.constant 0 : i32
    %c0_i32_0 = arith.constant 0 : i32
    %c0_i32_1 = arith.constant 0 : i32
    return %arg1, %c0_i32, %c0_i32_0 : i32, i32, i32
  }
  func.func @transform_13(%arg0: i32, %arg1: i32) -> (i32, i32, i32) {
    %c0_i32 = arith.constant 0 : i32
    %c0_i32_0 = arith.constant 0 : i32
    %c0_i32_1 = arith.constant 0 : i32
    return %arg1, %c0_i32, %c0_i32_0 : i32, i32, i32
  }
  func.func @transform_14(%arg0: i32, %arg1: i32) -> (i32, i32, i32) {
    %c0_i32 = arith.constant 0 : i32
    %c0_i32_0 = arith.constant 0 : i32
    %c0_i32_1 = arith.constant 0 : i32
    return %arg1, %c0_i32, %c0_i32_0 : i32, i32, i32
  }
  func.func @transform_15(%arg0: i32, %arg1: i32) -> (i32, i32, i32) {
    %c0_i32 = arith.constant 0 : i32
    %c0_i32_0 = arith.constant 0 : i32
    %c0_i32_1 = arith.constant 0 : i32
    return %arg1, %c0_i32, %c0_i32_0 : i32, i32, i32
  }
  func.func @transform_16(%arg0: i32, %arg1: i32) -> (i32, i32) {
    %c0_i32 = arith.constant 0 : i32
    %c0_i32_0 = arith.constant 0 : i32
    %c0_i32_1 = arith.constant 0 : i32
    return %c0_i32, %c0_i32_0 : i32, i32
  }
  func.func @transform_17(%arg0: i32, %arg1: i32) -> (i32, i32) {
    %c0_i32 = arith.constant 0 : i32
    %c0_i32_0 = arith.constant 0 : i32
    %c0_i32_1 = arith.constant 0 : i32
    return %c0_i32, %c0_i32_0 : i32, i32
  }
  func.func @transform_18(%arg0: i32, %arg1: i32) -> (i32, i32) {
    %c0_i32 = arith.constant 0 : i32
    %c0_i32_0 = arith.constant 0 : i32
    %c0_i32_1 = arith.constant 0 : i32
    return %c0_i32, %c0_i32_0 : i32, i32
  }
  func.func @transform_19(%arg0: i32, %arg1: i32) -> (i32, i32) {
    %c0_i32 = arith.constant 0 : i32
    %c0_i32_0 = arith.constant 0 : i32
    %c0_i32_1 = arith.constant 0 : i32
    return %c0_i32, %c0_i32_0 : i32, i32
  }
  func.func @transform_20(%arg0: i32, %arg1: i32) -> (i32, i32, i32) {
    %c0_i32 = arith.constant 0 : i32
    %c0_i32_0 = arith.constant 0 : i32
    %c0_i32_1 = arith.constant 0 : i32
    return %arg0, %c0_i32, %c0_i32_0 : i32, i32, i32
  }
}

</mosaic_0001>

<llo_original>
// kernel: bert_classifier_forward.1
$region0: #{bert_classifier_forward.1}
  #allocation0 [shape = 'u32[]', space=smem, size = 0x4, offset = 0x4, fixed_abs, tag = 'smem constant byte address 0x4 - core index']
  #allocation1 [shape = 'u32[144,128]{1,0:T(1,128)}', space=vmem, size = 0x12000, scoped, tag = 'internal scratch']
  #allocation2 [shape = 'f32[8,128]{1,0:T(8,128)}', space=vmem, size = 0x1000, scoped, tag = 'scratch operand']
  %s0 = inlined_call_operand.vmem [shape: f32[16,128], index: 0, kind: input, shape index: {}]
  %s1 = inlined_call_operand.vmem [shape: f32[2,1,8], index: 1, kind: input, shape index: {}]
  %s2 = inlined_call_operand.vmem [shape: f32[1,128], index: 2, kind: input, shape index: {}]
  %s3 = inlined_call_operand.hbm [shape: f32[1,128], index: 3, kind: input, shape index: {}]
  %s4 = inlined_call_operand.hbm [shape: bf16[2,128,384], index: 4, kind: input, shape index: {}]
  %s5 = inlined_call_operand.vmem [shape: f32[2,1,384], index: 5, kind: input, shape index: {}]
  %s6 = inlined_call_operand.hbm [shape: bf16[2,128,128], index: 6, kind: input, shape index: {}]
  %s7 = inlined_call_operand.vmem [shape: f32[2,1,128], index: 7, kind: input, shape index: {}]
  %s8 = inlined_call_operand.vmem [shape: f32[2,1,128], index: 8, kind: input, shape index: {}]
  %s9 = inlined_call_operand.vmem [shape: f32[2,1,128], index: 9, kind: input, shape index: {}]
  %s10 = inlined_call_operand.vmem [shape: bf16[2,128,256], index: 10, kind: input, shape index: {}]
  %s11 = inlined_call_operand.vmem [shape: f32[2,1,256], index: 11, kind: input, shape index: {}]
  %s12 = inlined_call_operand.hbm [shape: bf16[2,256,128], index: 12, kind: input, shape index: {}]
  %s13 = inlined_call_operand.vmem [shape: f32[2,1,128], index: 13, kind: input, shape index: {}]
  %s14 = inlined_call_operand.hbm [shape: f32[2,1,128], index: 14, kind: input, shape index: {}]
  %s15 = inlined_call_operand.hbm [shape: f32[2,1,128], index: 15, kind: input, shape index: {}]
  %s16 = inlined_call_operand.hbm [shape: bf16[128,128], index: 16, kind: input, shape index: {}]
  %s17 = inlined_call_operand.hbm [shape: f32[1,128], index: 17, kind: input, shape index: {}]
  %s18 = inlined_call_operand.hbm [shape: bf16[128,128], index: 18, kind: input, shape index: {}]
  %s19 = inlined_call_operand.vmem [shape: f32[1,128], index: 19, kind: input, shape index: {}]
  %s20 = inlined_call_operand.vmem [shape: f32[2,1,128], index: 20, kind: output, shape index: {}]
  %s21 = sld [smem:[#allocation0]]
  $region157: #{bert_classifier_forward.1} parent=0
    _
  %s23 = ssub.s32 1, %s21
  %s24 = scalar_select 0, %s23, %s21
  $region1: #{bert_classifier_forward.1} parent=0
    #allocation3 [shape = 'u8[512]{0}', space=vmem, size = 0x400, scoped, tag = 'input window, operand 3, single buffered']
    #allocation4 [shape = 's32[2]{0}', space=sflag, size = 0x8, scoped, tag = 'scoped memory for bert_classifier_forward.1']
    #allocation5 [shape = 'u8[196608]{0}', space=vmem, size = 0x30000, scoped, tag = 'input window, operand 4']
    #allocation6 [shape = 's32[2]{0}', space=sflag, size = 0x8, scoped, tag = 'scoped memory for bert_classifier_forward.1']
    #allocation7 [shape = 'u8[65536]{0}', space=vmem, size = 0x10000, scoped, tag = 'input window, operand 6']
    #allocation8 [shape = 'u8[131072]{0}', space=vmem, size = 0x20000, scoped, tag = 'input window, operand 12']
    #allocation9 [shape = 's32[2]{0}', space=sflag, size = 0x8, scoped, tag = 'scoped memory for bert_classifier_forward.1']
    #allocation10 [shape = 'u8[1024]{0}', space=vmem, size = 0x400, scoped, tag = 'input window, operand 14']
    #allocation11 [shape = 'u8[1024]{0}', space=vmem, size = 0x400, scoped, tag = 'input window, operand 15']
    #allocation12 [shape = 's32[2]{0}', space=sflag, size = 0x8, scoped, tag = 'scoped memory for bert_classifier_forward.1']
    #allocation13 [shape = 'u8[32768]{0}', space=vmem, size = 0x8000, scoped, tag = 'input window, operand 16, single buffered']
    #allocation14 [shape = 'u8[512]{0}', space=vmem, size = 0x400, scoped, tag = 'input window, operand 17, single buffered']
    #allocation15 [shape = 's32[1]{0}', space=sflag, size = 0x4, scoped, tag = 'scoped memory for bert_classifier_forward.1']
    #allocation16 [shape = 'u8[32768]{0}', space=vmem, size = 0x8000, scoped, tag = 'input window, operand 18, single buffered']
    %25 = vsyncpa [#allocation4], 0
    %26 = vsyncpa [#allocation6], 0
    %s27 = scalar_lea.sflag [#allocation6], 1
    %28 = vsyncpa %s27, 0
    %29 = vsyncpa [#allocation9], 0
    %s30 = scalar_lea.sflag [#allocation9], 1
    %31 = vsyncpa %s30, 0
    %32 = vsyncpa [#allocation12], 0
    %s33 = scalar_lea.sflag [#allocation12], 1
    %34 = vsyncpa %s33, 0
    %35 = vsyncpa [#allocation15], 0
    loop: start=0, step=1, limit=6
    $region2: #{bert_classifier_forward.1} parent=1 // loop_pre_header
      _
    $region3: #{bert_classifier_forward.1} parent=1 // loop_header
      %s37 = sphi 0, %s41
      %p38 = scmp.ge.s32.totalorder %s37, 6
      %s44 = sphi 0, %s56
      %s45 = sphi 0, %s52
      %s46 = sphi 0, %s44
      %s47 = sphi 0, %s45
      %s48 = sphi 0, %s46
      %s49 = sphi 0, %s47
      %s59 = sphi 0, %s61
      %s62 = sphi 0, %s59
      %s63 = sphi 0, %s62
      %s79 = sphi 0, %s63
      %s85 = sphi 0, %s87
      %s88 = sphi 0, %s85
      %s89 = sphi 0, %s88
      %s105 = sphi 0, %s89
      %s109 = sphi 0, %s109
      %s111 = sphi 0, %s109
      %s112 = sphi 0, %s111
      %s126 = sphi 0, %s112
      %s130 = sphi 0, %s130
      %s132 = sphi 0, %s130
      %s133 = sphi 0, %s132
      %s147 = sphi 0, %s133
      %s153 = sphi 0, %s155
      %s156 = sphi 0, %s153
      %s157 = sphi 0, %s156
      %s173 = sphi 0, %s157
      %s179 = sphi 0, %s181
      %s182 = sphi 0, %s179
      %s183 = sphi 0, %s182
      %s199 = sphi 0, %s183
      %s205 = sphi 0, %s207
      %s208 = sphi 0, %s205
      %s209 = sphi 0, %s208
      %s225 = sphi 0, %s209
      %s231 = sphi 0, %s233
      %s234 = sphi 0, %s231
      %s235 = sphi 0, %s234
      %s251 = sphi 0, %s235
      %s257 = sphi 0, %s259
      %s260 = sphi 0, %s257
      %s261 = sphi 0, %s260
      %s277 = sphi 0, %s261
      %s283 = sphi 0, %s285
      %s286 = sphi 0, %s283
      %s287 = sphi 0, %s286
      %s303 = sphi 0, %s287
      %s309 = sphi 0, %s311
      %s312 = sphi 0, %s309
      %s313 = sphi 0, %s312
      %s329 = sphi 0, %s313
      %s335 = sphi 0, %s337
      %s338 = sphi 0, %s335
      %s339 = sphi 0, %s338
      %s355 = sphi 0, %s339
      %s361 = sphi 0, %s363
      %s364 = sphi 0, %s361
      %s365 = sphi 0, %s364
      %s381 = sphi 0, %s365
      %s387 = sphi 0, %s389
      %s390 = sphi 0, %s387
      %s391 = sphi 0, %s390
      %s407 = sphi 0, %s391
      %s413 = sphi 0, %s415
      %s416 = sphi 0, %s413
      %s417 = sphi 0, %s416
      %s433 = sphi 0, %s417
      %s439 = sphi 0, %s441
      %s442 = sphi 0, %s439
      %s443 = sphi 0, %s442
      %s459 = sphi 0, %s443
      %s463 = sphi 0, %s463
      %s465 = sphi 0, %s463
      %s466 = sphi 0, %s465
      %s480 = sphi 0, %s466
      %s484 = sphi 0, %s484
      %s486 = sphi 0, %s484
      %s487 = sphi 0, %s486
      %s501 = sphi 0, %s487
      %s505 = sphi 0, %s505
      %s507 = sphi 0, %s505
      %s508 = sphi 0, %s507
      %s522 = sphi 0, %s508
      %s526 = sphi 0, %s526
      %s528 = sphi 0, %s526
      %s529 = sphi 0, %s528
      %s543 = sphi 0, %s529
      %s549 = sphi 0, %s551
      %s552 = sphi 0, %s549
      %s553 = sphi 0, %s552
      %s569 = sphi 0, %s553
    $region4: #{bert_classifier_forward.1} parent=1 // loop_header_branch
      %40 = sbr.rel (%p38) target = $region8
    $region5: #{bert_classifier_forward.1} parent=1 // loop_body
      %s42 = ssub.s32 %s37, 1
      %s43 = ssub.s32 %s37, 2
      %s50 = sadd.s32 1, %s45
      %p51 = scmp.ge.s32.totalorder %s50, 2
      %s52 = scalar_select %p51, 0, %s50
      %s53 = sadd.s32 1, %s44
      %s54 = scalar_select %p51, %s53, %s44
      %p55 = scmp.ge.s32.totalorder %s54, 2
      %s56 = scalar_select %p55, 0, %s54
      %s57 = ssub.s32 %s44, %s56
      %p58 = scmp.eq.s32.totalorder %s57, 0
      %s60 = sadd.s32 %s59, 1
      %s61 = scalar_select %p58, %s59, %s60
      %p64 = pneg %p58
      %p65 = scmp.eq.s32.totalorder %s37, 3
      %p66 = por %p64, %p65
      %p67 = scmp.ne.s32.totalorder %s59, %s62
      %p68 = scmp.eq.s32.totalorder %s37, 0
      %p69 = por %p67, %p68
      %p70 = scmp.ne.s32.totalorder %s59, %s62
      %p71 = scmp.eq.s32.totalorder %s42, 3
      %p72 = por %p70, %p71
      %p73 = scmp.ne.s32.totalorder %s62, %s63
      %p74 = scmp.eq.s32.totalorder %s42, 0
      %p75 = por %p73, %p74
      %p76 = scmp.ne.s32.totalorder %s62, %s63
      %p77 = scmp.eq.s32.totalorder %s43, 3
      %p78 = por %p76, %p77
      %p80 = scmp.ne.s32.totalorder %s63, %s79
      %p81 = scmp.eq.s32.totalorder %s43, 0
      %p82 = por %p80, %p81
      %s83 = ssub.s32 %s44, %s56
      %p84 = scmp.eq.s32.totalorder %s83, 0
      %s86 = sadd.s32 %s85, 1
      %s87 = scalar_select %p84, %s85, %s86
      %p90 = pneg %p84
      %p91 = scmp.eq.s32.totalorder %s37, 3
      %p92 = por %p90, %p91
      %p93 = scmp.ne.s32.totalorder %s85, %s88
      %p94 = scmp.eq.s32.totalorder %s37, 0
      %p95 = por %p93, %p94
      %p96 = scmp.ne.s32.totalorder %s85, %s88
      %p97 = scmp.eq.s32.totalorder %s42, 3
      %p98 = por %p96, %p97
      %p99 = scmp.ne.s32.totalorder %s88, %s89
      %p100 = scmp.eq.s32.totalorder %s42, 0
      %p101 = por %p99, %p100
      %p102 = scmp.ne.s32.totalorder %s88, %s89
      %p103 = scmp.eq.s32.totalorder %s43, 3
      %p104 = por %p102, %p103
      %p106 = scmp.ne.s32.totalorder %s89, %s105
      %p107 = scmp.eq.s32.totalorder %s43, 0
      %p108 = por %p106, %p107
      %s110 = sadd.s32 %s109, 1
      %p113 = scmp.eq.s32.totalorder %s37, 3
      %p114 = scmp.ne.s32.totalorder %s109, %s111
      %p115 = scmp.eq.s32.totalorder %s37, 0
      %p116 = por %p114, %p115
      %p117 = scmp.ne.s32.totalorder %s109, %s111
      %p118 = scmp.eq.s32.totalorder %s42, 3
      %p119 = por %p117, %p118
      %p120 = scmp.ne.s32.totalorder %s111, %s112
      %p121 = scmp.eq.s32.totalorder %s42, 0
      %p122 = por %p120, %p121
      %p123 = scmp.ne.s32.totalorder %s111, %s112
      %p124 = scmp.eq.s32.totalorder %s43, 3
      %p125 = por %p123, %p124
      %p127 = scmp.ne.s32.totalorder %s112, %s126
      %p128 = scmp.eq.s32.totalorder %s43, 0
      %p129 = por %p127, %p128
      %s131 = sadd.s32 %s130, 1
      %p134 = scmp.eq.s32.totalorder %s37, 3
      %p135 = scmp.ne.s32.totalorder %s130, %s132
      %p136 = scmp.eq.s32.totalorder %s37, 0
      %p137 = por %p135, %p136
      %p138 = scmp.ne.s32.totalorder %s130, %s132
      %p139 = scmp.eq.s32.totalorder %s42, 3
      %p140 = por %p138, %p139
      %p141 = scmp.ne.s32.totalorder %s132, %s133
      %p142 = scmp.eq.s32.totalorder %s42, 0
      %p143 = por %p141, %p142
      %p144 = scmp.ne.s32.totalorder %s132, %s133
      %p145 = scmp.eq.s32.totalorder %s43, 3
      %p146 = por %p144, %p145
      %p148 = scmp.ne.s32.totalorder %s133, %s147
      %p149 = scmp.eq.s32.totalorder %s43, 0
      %p150 = por %p148, %p149
      %s151 = ssub.s32 %s45, %s52
      %p152 = scmp.eq.s32.totalorder %s151, 0
      %s154 = sadd.s32 %s153, 1
      %s155 = scalar_select %p152, %s153, %s154
      %p158 = pneg %p152
      %p159 = scmp.eq.s32.totalorder %s37, 3
      %p160 = por %p158, %p159
      %p161 = scmp.ne.s32.totalorder %s153, %s156
      %p162 = scmp.eq.s32.totalorder %s37, 0
      %p163 = por %p161, %p162
      %p164 = scmp.ne.s32.totalorder %s153, %s156
      %p165 = scmp.eq.s32.totalorder %s42, 3
      %p166 = por %p164, %p165
      %p167 = scmp.ne.s32.totalorder %s156, %s157
      %p168 = scmp.eq.s32.totalorder %s42, 0
      %p169 = por %p167, %p168
      %p170 = scmp.ne.s32.totalorder %s156, %s157
      %p171 = scmp.eq.s32.totalorder %s43, 3
      %p172 = por %p170, %p171
      %p174 = scmp.ne.s32.totalorder %s157, %s173
      %p175 = scmp.eq.s32.totalorder %s43, 0
      %p176 = por %p174, %p175
      %s177 = ssub.s32 %s45, %s52
      %p178 = scmp.eq.s32.totalorder %s177, 0
      %s180 = sadd.s32 %s179, 1
      %s181 = scalar_select %p178, %s179, %s180
      %p184 = pneg %p178
      %p185 = scmp.eq.s32.totalorder %s37, 3
      %p186 = por %p184, %p185
      %p187 = scmp.ne.s32.totalorder %s179, %s182
      %p188 = scmp.eq.s32.totalorder %s37, 0
      %p189 = por %p187, %p188
      %p190 = scmp.ne.s32.totalorder %s179, %s182
      %p191 = scmp.eq.s32.totalorder %s42, 3
      %p192 = por %p190, %p191
      %p193 = scmp.ne.s32.totalorder %s182, %s183
      %p194 = scmp.eq.s32.totalorder %s42, 0
      %p195 = por %p193, %p194
      %p196 = scmp.ne.s32.totalorder %s182, %s183
      %p197 = scmp.eq.s32.totalorder %s43, 3
      %p198 = por %p196, %p197
      %p200 = scmp.ne.s32.totalorder %s183, %s199
      %p201 = scmp.eq.s32.totalorder %s43, 0
      %p202 = por %p200, %p201
      %s203 = ssub.s32 %s45, %s52
      %p204 = scmp.eq.s32.totalorder %s203, 0
      %s206 = sadd.s32 %s205, 1
      %s207 = scalar_select %p204, %s205, %s206
      %p210 = pneg %p204
      %p211 = scmp.eq.s32.totalorder %s37, 3
      %p212 = por %p210, %p211
      %p213 = scmp.ne.s32.totalorder %s205, %s208
      %p214 = scmp.eq.s32.totalorder %s37, 0
      %p215 = por %p213, %p214
      %p216 = scmp.ne.s32.totalorder %s205, %s208
      %p217 = scmp.eq.s32.totalorder %s42, 3
      %p218 = por %p216, %p217
      %p219 = scmp.ne.s32.totalorder %s208, %s209
      %p220 = scmp.eq.s32.totalorder %s42, 0
      %p221 = por %p219, %p220
      %p222 = scmp.ne.s32.totalorder %s208, %s209
      %p223 = scmp.eq.s32.totalorder %s43, 3
      %p224 = por %p222, %p223
      %p226 = scmp.ne.s32.totalorder %s209, %s225
      %p227 = scmp.eq.s32.totalorder %s43, 0
      %p228 = por %p226, %p227
      %s229 = ssub.s32 %s45, %s52
      %p230 = scmp.eq.s32.totalorder %s229, 0
      %s232 = sadd.s32 %s231, 1
      %s233 = scalar_select %p230, %s231, %s232
      %p236 = pneg %p230
      %p237 = scmp.eq.s32.totalorder %s37, 3
      %p238 = por %p236, %p237
      %p239 = scmp.ne.s32.totalorder %s231, %s234
      %p240 = scmp.eq.s32.totalorder %s37, 0
      %p241 = por %p239, %p240
      %p242 = scmp.ne.s32.totalorder %s231, %s234
      %p243 = scmp.eq.s32.totalorder %s42, 3
      %p244 = por %p242, %p243
      %p245 = scmp.ne.s32.totalorder %s234, %s235
      %p246 = scmp.eq.s32.totalorder %s42, 0
      %p247 = por %p245, %p246
      %p248 = scmp.ne.s32.totalorder %s234, %s235
      %p249 = scmp.eq.s32.totalorder %s43, 3
      %p250 = por %p248, %p249
      %p252 = scmp.ne.s32.totalorder %s235, %s251
      %p253 = scmp.eq.s32.totalorder %s43, 0
      %p254 = por %p252, %p253
      %s255 = ssub.s32 %s45, %s52
      %p256 = scmp.eq.s32.totalorder %s255, 0
      %s258 = sadd.s32 %s257, 1
      %s259 = scalar_select %p256, %s257, %s258
      %p262 = pneg %p256
      %p263 = scmp.eq.s32.totalorder %s37, 3
      %p264 = por %p262, %p263
      %p265 = scmp.ne.s32.totalorder %s257, %s260
      %p266 = scmp.eq.s32.totalorder %s37, 0
      %p267 = por %p265, %p266
      %p268 = scmp.ne.s32.totalorder %s257, %s260
      %p269 = scmp.eq.s32.totalorder %s42, 3
      %p270 = por %p268, %p269
      %p271 = scmp.ne.s32.totalorder %s260, %s261
      %p272 = scmp.eq.s32.totalorder %s42, 0
      %p273 = por %p271, %p272
      %p274 = scmp.ne.s32.totalorder %s260, %s261
      %p275 = scmp.eq.s32.totalorder %s43, 3
      %p276 = por %p274, %p275
      %p278 = scmp.ne.s32.totalorder %s261, %s277
      %p279 = scmp.eq.s32.totalorder %s43, 0
      %p280 = por %p278, %p279
      %s281 = ssub.s32 %s45, %s52
      %p282 = scmp.eq.s32.totalorder %s281, 0
      %s284 = sadd.s32 %s283, 1
      %s285 = scalar_select %p282, %s283, %s284
      %p288 = pneg %p282
      %p289 = scmp.eq.s32.totalorder %s37, 3
      %p290 = por %p288, %p289
      %p291 = scmp.ne.s32.totalorder %s283, %s286
      %p292 = scmp.eq.s32.totalorder %s37, 0
      %p293 = por %p291, %p292
      %p294 = scmp.ne.s32.totalorder %s283, %s286
      %p295 = scmp.eq.s32.totalorder %s42, 3
      %p296 = por %p294, %p295
      %p297 = scmp.ne.s32.totalorder %s286, %s287
      %p298 = scmp.eq.s32.totalorder %s42, 0
      %p299 = por %p297, %p298
      %p300 = scmp.ne.s32.totalorder %s286, %s287
      %p301 = scmp.eq.s32.totalorder %s43, 3
      %p302 = por %p300, %p301
      %p304 = scmp.ne.s32.totalorder %s287, %s303
      %p305 = scmp.eq.s32.totalorder %s43, 0
      %p306 = por %p304, %p305
      %s307 = ssub.s32 %s45, %s52
      %p308 = scmp.eq.s32.totalorder %s307, 0
      %s310 = sadd.s32 %s309, 1
      %s311 = scalar_select %p308, %s309, %s310
      %p314 = pneg %p308
      %p315 = scmp.eq.s32.totalorder %s37, 3
      %p316 = por %p314, %p315
      %p317 = scmp.ne.s32.totalorder %s309, %s312
      %p318 = scmp.eq.s32.totalorder %s37, 0
      %p319 = por %p317, %p318
      %p320 = scmp.ne.s32.totalorder %s309, %s312
      %p321 = scmp.eq.s32.totalorder %s42, 3
      %p322 = por %p320, %p321
      %p323 = scmp.ne.s32.totalorder %s312, %s313
      %p324 = scmp.eq.s32.totalorder %s42, 0
      %p325 = por %p323, %p324
      %p326 = scmp.ne.s32.totalorder %s312, %s313
      %p327 = scmp.eq.s32.totalorder %s43, 3
      %p328 = por %p326, %p327
      %p330 = scmp.ne.s32.totalorder %s313, %s329
      %p331 = scmp.eq.s32.totalorder %s43, 0
      %p332 = por %p330, %p331
      %s333 = ssub.s32 %s45, %s52
      %p334 = scmp.eq.s32.totalorder %s333, 0
      %s336 = sadd.s32 %s335, 1
      %s337 = scalar_select %p334, %s335, %s336
      %p340 = pneg %p334
      %p341 = scmp.eq.s32.totalorder %s37, 3
      %p342 = por %p340, %p341
      %p343 = scmp.ne.s32.totalorder %s335, %s338
      %p344 = scmp.eq.s32.totalorder %s37, 0
      %p345 = por %p343, %p344
      %p346 = scmp.ne.s32.totalorder %s335, %s338
      %p347 = scmp.eq.s32.totalorder %s42, 3
      %p348 = por %p346, %p347
      %p349 = scmp.ne.s32.totalorder %s338, %s339
      %p350 = scmp.eq.s32.totalorder %s42, 0
      %p351 = por %p349, %p350
      %p352 = scmp.ne.s32.totalorder %s338, %s339
      %p353 = scmp.eq.s32.totalorder %s43, 3
      %p354 = por %p352, %p353
      %p356 = scmp.ne.s32.totalorder %s339, %s355
      %p357 = scmp.eq.s32.totalorder %s43, 0
      %p358 = por %p356, %p357
      %s359 = ssub.s32 %s45, %s52
      %p360 = scmp.eq.s32.totalorder %s359, 0
      %s362 = sadd.s32 %s361, 1
      %s363 = scalar_select %p360, %s361, %s362
      %p366 = pneg %p360
      %p367 = scmp.eq.s32.totalorder %s37, 3
      %p368 = por %p366, %p367
      %p369 = scmp.ne.s32.totalorder %s361, %s364
      %p370 = scmp.eq.s32.totalorder %s37, 0
      %p371 = por %p369, %p370
      %p372 = scmp.ne.s32.totalorder %s361, %s364
      %p373 = scmp.eq.s32.totalorder %s42, 3
      %p374 = por %p372, %p373
      %p375 = scmp.ne.s32.totalorder %s364, %s365
      %p376 = scmp.eq.s32.totalorder %s42, 0
      %p377 = por %p375, %p376
      %p378 = scmp.ne.s32.totalorder %s364, %s365
      %p379 = scmp.eq.s32.totalorder %s43, 3
      %p380 = por %p378, %p379
      %p382 = scmp.ne.s32.totalorder %s365, %s381
      %p383 = scmp.eq.s32.totalorder %s43, 0
      %p384 = por %p382, %p383
      %s385 = ssub.s32 %s45, %s52
      %p386 = scmp.eq.s32.totalorder %s385, 0
      %s388 = sadd.s32 %s387, 1
      %s389 = scalar_select %p386, %s387, %s388
      %p392 = pneg %p386
      %p393 = scmp.eq.s32.totalorder %s37, 3
      %p394 = por %p392, %p393
      %p395 = scmp.ne.s32.totalorder %s387, %s390
      %p396 = scmp.eq.s32.totalorder %s37, 0
      %p397 = por %p395, %p396
      %p398 = scmp.ne.s32.totalorder %s387, %s390
      %p399 = scmp.eq.s32.totalorder %s42, 3
      %p400 = por %p398, %p399
      %p401 = scmp.ne.s32.totalorder %s390, %s391
      %p402 = scmp.eq.s32.totalorder %s42, 0
      %p403 = por %p401, %p402
      %p404 = scmp.ne.s32.totalorder %s390, %s391
      %p405 = scmp.eq.s32.totalorder %s43, 3
      %p406 = por %p404, %p405
      %p408 = scmp.ne.s32.totalorder %s391, %s407
      %p409 = scmp.eq.s32.totalorder %s43, 0
      %p410 = por %p408, %p409
      %s411 = ssub.s32 %s45, %s52
      %p412 = scmp.eq.s32.totalorder %s411, 0
      %s414 = sadd.s32 %s413, 1
      %s415 = scalar_select %p412, %s413, %s414
      %p418 = pneg %p412
      %p419 = scmp.eq.s32.totalorder %s37, 3
      %p420 = por %p418, %p419
      %p421 = scmp.ne.s32.totalorder %s413, %s416
      %p422 = scmp.eq.s32.totalorder %s37, 0
      %p423 = por %p421, %p422
      %p424 = scmp.ne.s32.totalorder %s413, %s416
      %p425 = scmp.eq.s32.totalorder %s42, 3
      %p426 = por %p424, %p425
      %p427 = scmp.ne.s32.totalorder %s416, %s417
      %p428 = scmp.eq.s32.totalorder %s42, 0
      %p429 = por %p427, %p428
      %p430 = scmp.ne.s32.totalorder %s416, %s417
      %p431 = scmp.eq.s32.totalorder %s43, 3
      %p432 = por %p430, %p431
      %p434 = scmp.ne.s32.totalorder %s417, %s433
      %p435 = scmp.eq.s32.totalorder %s43, 0
      %p436 = por %p434, %p435
      %s437 = ssub.s32 %s45, %s52
      %p438 = scmp.eq.s32.totalorder %s437, 0
      %s440 = sadd.s32 %s439, 1
      %s441 = scalar_select %p438, %s439, %s440
      %p444 = pneg %p438
      %p445 = scmp.eq.s32.totalorder %s37, 3
      %p446 = por %p444, %p445
      %p447 = scmp.ne.s32.totalorder %s439, %s442
      %p448 = scmp.eq.s32.totalorder %s37, 0
      %p449 = por %p447, %p448
      %p450 = scmp.ne.s32.totalorder %s439, %s442
      %p451 = scmp.eq.s32.totalorder %s42, 3
      %p452 = por %p450, %p451
      %p453 = scmp.ne.s32.totalorder %s442, %s443
      %p454 = scmp.eq.s32.totalorder %s42, 0
      %p455 = por %p453, %p454
      %p456 = scmp.ne.s32.totalorder %s442, %s443
      %p457 = scmp.eq.s32.totalorder %s43, 3
      %p458 = por %p456, %p457
      %p460 = scmp.ne.s32.totalorder %s443, %s459
      %p461 = scmp.eq.s32.totalorder %s43, 0
      %p462 = por %p460, %p461
      %s464 = sadd.s32 %s463, 1
      %p467 = scmp.eq.s32.totalorder %s37, 3
      %p468 = scmp.ne.s32.totalorder %s463, %s465
      %p469 = scmp.eq.s32.totalorder %s37, 0
      %p470 = por %p468, %p469
      %p471 = scmp.ne.s32.totalorder %s463, %s465
      %p472 = scmp.eq.s32.totalorder %s42, 3
      %p473 = por %p471, %p472
      %p474 = scmp.ne.s32.totalorder %s465, %s466
      %p475 = scmp.eq.s32.totalorder %s42, 0
      %p476 = por %p474, %p475
      %p477 = scmp.ne.s32.totalorder %s465, %s466
      %p478 = scmp.eq.s32.totalorder %s43, 3
      %p479 = por %p477, %p478
      %p481 = scmp.ne.s32.totalorder %s466, %s480
      %p482 = scmp.eq.s32.totalorder %s43, 0
      %p483 = por %p481, %p482
      %s485 = sadd.s32 %s484, 1
      %p488 = scmp.eq.s32.totalorder %s37, 3
      %p489 = scmp.ne.s32.totalorder %s484, %s486
      %p490 = scmp.eq.s32.totalorder %s37, 0
      %p491 = por %p489, %p490
      %p492 = scmp.ne.s32.totalorder %s484, %s486
      %p493 = scmp.eq.s32.totalorder %s42, 3
      %p494 = por %p492, %p493
      %p495 = scmp.ne.s32.totalorder %s486, %s487
      %p496 = scmp.eq.s32.totalorder %s42, 0
      %p497 = por %p495, %p496
      %p498 = scmp.ne.s32.totalorder %s486, %s487
      %p499 = scmp.eq.s32.totalorder %s43, 3
      %p500 = por %p498, %p499
      %p502 = scmp.ne.s32.totalorder %s487, %s501
      %p503 = scmp.eq.s32.totalorder %s43, 0
      %p504 = por %p502, %p503
      %s506 = sadd.s32 %s505, 1
      %p509 = scmp.eq.s32.totalorder %s37, 3
      %p510 = scmp.ne.s32.totalorder %s505, %s507
      %p511 = scmp.eq.s32.totalorder %s37, 0
      %p512 = por %p510, %p511
      %p513 = scmp.ne.s32.totalorder %s505, %s507
      %p514 = scmp.eq.s32.totalorder %s42, 3
      %p515 = por %p513, %p514
      %p516 = scmp.ne.s32.totalorder %s507, %s508
      %p517 = scmp.eq.s32.totalorder %s42, 0
      %p518 = por %p516, %p517
      %p519 = scmp.ne.s32.totalorder %s507, %s508
      %p520 = scmp.eq.s32.totalorder %s43, 3
      %p521 = por %p519, %p520
      %p523 = scmp.ne.s32.totalorder %s508, %s522
      %p524 = scmp.eq.s32.totalorder %s43, 0
      %p525 = por %p523, %p524
      %s527 = sadd.s32 %s526, 1
      %p530 = scmp.eq.s32.totalorder %s37, 3
      %p531 = scmp.ne.s32.totalorder %s526, %s528
      %p532 = scmp.eq.s32.totalorder %s37, 0
      %p533 = por %p531, %p532
      %p534 = scmp.ne.s32.totalorder %s526, %s528
      %p535 = scmp.eq.s32.totalorder %s42, 3
      %p536 = por %p534, %p535
      %p537 = scmp.ne.s32.totalorder %s528, %s529
      %p538 = scmp.eq.s32.totalorder %s42, 0
      %p539 = por %p537, %p538
      %p540 = scmp.ne.s32.totalorder %s528, %s529
      %p541 = scmp.eq.s32.totalorder %s43, 3
      %p542 = por %p540, %p541
      %p544 = scmp.ne.s32.totalorder %s529, %s543
      %p545 = scmp.eq.s32.totalorder %s43, 0
      %p546 = por %p544, %p545
      %s547 = ssub.s32 %s44, %s56
      %p548 = scmp.eq.s32.totalorder %s547, 0
      %s550 = sadd.s32 %s549, 1
      %s551 = scalar_select %p548, %s549, %s550
      %p554 = pneg %p548
      %p555 = scmp.eq.s32.totalorder %s37, 3
      %p556 = por %p554, %p555
      %p557 = scmp.ne.s32.totalorder %s549, %s552
      %p558 = scmp.eq.s32.totalorder %s37, 0
      %p559 = por %p557, %p558
      %p560 = scmp.ne.s32.totalorder %s549, %s552
      %p561 = scmp.eq.s32.totalorder %s42, 3
      %p562 = por %p560, %p561
      %p563 = scmp.ne.s32.totalorder %s552, %s553
      %p564 = scmp.eq.s32.totalorder %s42, 0
      %p565 = por %p563, %p564
      %p566 = scmp.ne.s32.totalorder %s552, %s553
      %p567 = scmp.eq.s32.totalorder %s43, 3
      %p568 = por %p566, %p567
      %p570 = scmp.ne.s32.totalorder %s553, %s569
      %p571 = scmp.eq.s32.totalorder %s43, 0
      %p572 = por %p570, %p571
      %p573 = scmp.le.s32.totalorder 1, %s37
      %p574 = scmp.lt.s32.totalorder %s37, 5
      %p575 = pnand %p573, %p574
      %p576 = pneg %p575
      // Predicated region
      $region9: #{bert_classifier_forward.1} parent=5 // pred_check
        _
      $region10: #{bert_classifier_forward.1} parent=5 // pred_check_branch
        %578 = sbr.rel (%p575) target = $region12
      $region11: #{bert_classifier_forward.1} parent=5 // pred_region
        %s579 = ssub.s32 %s37, 1
        // Predicated region
        $region13: #{bert_classifier_forward.1} parent=11 // pred_check
          %p580 = pneg %p122
        $region14: #{bert_classifier_forward.1} parent=11 // pred_check_branch
          %582 = sbr.rel (%p580) target = $region16
        $region15: #{bert_classifier_forward.1} parent=11 // pred_region
          _
        $region16: #{bert_classifier_forward.1} parent=11 // pred_fallthru
          _
        // Predicated region
        $region17: #{bert_classifier_forward.1} parent=11 // pred_check
          %p583 = pneg %p143
        $region18: #{bert_classifier_forward.1} parent=11 // pred_check_branch
          %585 = sbr.rel (%p583) target = $region20
        $region19: #{bert_classifier_forward.1} parent=11 // pred_region
          %s587 = ssub.s32 16, 16
          %588 = vsyncadd [#allocation4], %s587
          %s590 = sshll.u32 [#allocation3], 4
          %s591 = int_to_ptr.vmem [resolvable:$true] %s590
          %593 = dma.hbm_to_vmem [thread:$0]  %s3, 16, %s591, [#allocation4]
        $region20: #{bert_classifier_forward.1} parent=11 // pred_fallthru
          _
        // Predicated region
        $region21: #{bert_classifier_forward.1} parent=11 // pred_check
          %p594 = pneg %p476
        $region22: #{bert_classifier_forward.1} parent=11 // pred_check_branch
          %596 = sbr.rel (%p594) target = $region24
        $region23: #{bert_classifier_forward.1} parent=11 // pred_region
          %s598 = ssub.s32 1024, 1024
          %599 = vsyncadd [#allocation12], %s598
          %s600 = sshll.u32 [#allocation13], 4
          %s601 = int_to_ptr.vmem [resolvable:$true] %s600
          %606 = dma.hbm_to_vmem [thread:$0]  %s16, 1024, %s601, [#allocation12], 64, 64, 4
        $region24: #{bert_classifier_forward.1} parent=11 // pred_fallthru
          _
        // Predicated region
        $region25: #{bert_classifier_forward.1} parent=11 // pred_check
          %p607 = pneg %p497
        $region26: #{bert_classifier_forward.1} parent=11 // pred_check_branch
          %609 = sbr.rel (%p607) target = $region28
        $region27: #{bert_classifier_forward.1} parent=11 // pred_region
          %s611 = ssub.s32 16, 16
          %612 = vsyncadd [#allocation15], %s611
          %s614 = sshll.u32 [#allocation14], 4
          %s615 = int_to_ptr.vmem [resolvable:$true] %s614
          %617 = dma.hbm_to_vmem [thread:$0]  %s17, 16, %s615, [#allocation15]
        $region28: #{bert_classifier_forward.1} parent=11 // pred_fallthru
          _
        // Predicated region
        $region29: #{bert_classifier_forward.1} parent=11 // pred_check
          %p618 = pneg %p518
        $region30: #{bert_classifier_forward.1} parent=11 // pred_check_branch
          %620 = sbr.rel (%p618) target = $region32
        $region31: #{bert_classifier_forward.1} parent=11 // pred_region
          %s622 = ssub.s32 1024, 1024
          %623 = vsyncadd [#allocation15], %s622
          %s624 = sshll.u32 [#allocation16], 4
          %s625 = int_to_ptr.vmem [resolvable:$true] %s624
          %630 = dma.hbm_to_vmem [thread:$0]  %s18, 1024, %s625, [#allocation15], 64, 64, 4
        $region32: #{bert_classifier_forward.1} parent=11 // pred_fallthru
          _
        // Predicated region
        $region33: #{bert_classifier_forward.1} parent=11 // pred_check
          %p631 = pneg %p539
        $region34: #{bert_classifier_forward.1} parent=11 // pred_check_branch
          %633 = sbr.rel (%p631) target = $region36
        $region35: #{bert_classifier_forward.1} parent=11 // pred_region
          _
        $region36: #{bert_classifier_forward.1} parent=11 // pred_fallthru
          _
      $region12: #{bert_classifier_forward.1} parent=5 // pred_fallthru
        _
      %p634 = scmp.lt.s32.totalorder %s37, 4
      // Predicated region
      $region37: #{bert_classifier_forward.1} parent=5 // pred_check
        %p635 = pneg %p634
      $region38: #{bert_classifier_forward.1} parent=5 // pred_check_branch
        %637 = sbr.rel (%p635) target = $region40
      $region39: #{bert_classifier_forward.1} parent=5 // pred_region
        // Predicated region
        $region41: #{bert_classifier_forward.1} parent=39 // pred_check
          %p638 = pneg %p69
        $region42: #{bert_classifier_forward.1} parent=39 // pred_check_branch
          %640 = sbr.rel (%p638) target = $region44
        $region43: #{bert_classifier_forward.1} parent=39 // pred_region
          %p641 = scmp.lt.s32.totalorder %s44, 1
          %s642 = scalar_select %p641, %s44, 1
          %s643 = smul.addr %s642, 8
          %s644 = scalar_lea.vmem %s0, %s643
        $region44: #{bert_classifier_forward.1} parent=39 // pred_fallthru
          _
        // Predicated region
        $region45: #{bert_classifier_forward.1} parent=39 // pred_check
          %p645 = pneg %p95
        $region46: #{bert_classifier_forward.1} parent=39 // pred_check_branch
          %647 = sbr.rel (%p645) target = $region48
        $region47: #{bert_classifier_forward.1} parent=39 // pred_region
          %p648 = scmp.lt.s32.totalorder %s44, 1
          %s649 = scalar_select %p648, %s44, 1
          %s650 = scalar_lea.vmem %s1, %s649
        $region48: #{bert_classifier_forward.1} parent=39 // pred_fallthru
          _
        // Predicated region
        $region49: #{bert_classifier_forward.1} parent=39 // pred_check
          %p651 = pneg %p163
        $region50: #{bert_classifier_forward.1} parent=39 // pred_check_branch
          %653 = sbr.rel (%p651) target = $region52
        $region51: #{bert_classifier_forward.1} parent=39 // pred_region
          %s654 = sand.u32 %s37, 1
          %s655 = scalar_lea.sflag [#allocation6], %s654
          %s656 = sand.u32 %s153, 1
          %s657 = smul.addr %s656, 192
          %s658 = scalar_lea.vmem [#allocation5], %s657
          %s660 = ssub.s32 3072, 3072
          %661 = vsyncadd %s655, %s660
          %s662 = smul.addr %s45, 48
          %s663 = smul.addr %s662, 64
          %s664 = scalar_lea.hbm %s4, %s663
          %s665 = sshll.u32 %s658, 4
          %s666 = int_to_ptr.vmem [resolvable:$true] %s665
          %671 = dma.hbm_to_vmem [thread:$0]  %s664, 3072, %s666, %s655, 192, 192, 12
        $region52: #{bert_classifier_forward.1} parent=39 // pred_fallthru
          _
        // Predicated region
        $region53: #{bert_classifier_forward.1} parent=39 // pred_check
          %p672 = pneg %p189
        $region54: #{bert_classifier_forward.1} parent=39 // pred_check_branch
          %674 = sbr.rel (%p672) target = $region56
        $region55: #{bert_classifier_forward.1} parent=39 // pred_region
          %p675 = scmp.lt.s32.totalorder %s45, 1
          %s676 = scalar_select %p675, %s45, 1
          %s677 = smul.addr %s676, 3
          %s678 = scalar_lea.vmem %s5, %s677
        $region56: #{bert_classifier_forward.1} parent=39 // pred_fallthru
          _
        // Predicated region
        $region57: #{bert_classifier_forward.1} parent=39 // pred_check
          %p679 = pneg %p215
        $region58: #{bert_classifier_forward.1} parent=39 // pred_check_branch
          %681 = sbr.rel (%p679) target = $region60
        $region59: #{bert_classifier_forward.1} parent=39 // pred_region
          %s682 = sand.u32 %s37, 1
          %s683 = scalar_lea.sflag [#allocation6], %s682
          %s684 = sand.u32 %s205, 1
          %s685 = smul.addr %s684, 64
          %s686 = scalar_lea.vmem [#allocation7], %s685
          %s688 = ssub.s32 1024, 1024
          %689 = vsyncadd %s683, %s688
          %s690 = smul.addr %s45, 16
          %s691 = smul.addr %s690, 64
          %s692 = scalar_lea.hbm %s6, %s691
          %s693 = sshll.u32 %s686, 4
          %s694 = int_to_ptr.vmem [resolvable:$true] %s693
          %699 = dma.hbm_to_vmem [thread:$0]  %s692, 1024, %s694, %s683, 64, 64, 4
        $region60: #{bert_classifier_forward.1} parent=39 // pred_fallthru
          _
        // Predicated region
        $region61: #{bert_classifier_forward.1} parent=39 // pred_check
          %p700 = pneg %p241
        $region62: #{bert_classifier_forward.1} parent=39 // pred_check_branch
          %702 = sbr.rel (%p700) target = $region64
        $region63: #{bert_classifier_forward.1} parent=39 // pred_region
          %p703 = scmp.lt.s32.totalorder %s45, 1
          %s704 = scalar_select %p703, %s45, 1
          %s705 = scalar_lea.vmem %s7, %s704
        $region64: #{bert_classifier_forward.1} parent=39 // pred_fallthru
          _
        // Predicated region
        $region65: #{bert_classifier_forward.1} parent=39 // pred_check
          %p706 = pneg %p267
        $region66: #{bert_classifier_forward.1} parent=39 // pred_check_branch
          %708 = sbr.rel (%p706) target = $region68
        $region67: #{bert_classifier_forward.1} parent=39 // pred_region
          %p709 = scmp.lt.s32.totalorder %s45, 1
          %s710 = scalar_select %p709, %s45, 1
          %s711 = scalar_lea.vmem %s8, %s710
        $region68: #{bert_classifier_forward.1} parent=39 // pred_fallthru
          _
        // Predicated region
        $region69: #{bert_classifier_forward.1} parent=39 // pred_check
          %p712 = pneg %p293
        $region70: #{bert_classifier_forward.1} parent=39 // pred_check_branch
          %714 = sbr.rel (%p712) target = $region72
        $region71: #{bert_classifier_forward.1} parent=39 // pred_region
          %p715 = scmp.lt.s32.totalorder %s45, 1
          %s716 = scalar_select %p715, %s45, 1
          %s717 = scalar_lea.vmem %s9, %s716
        $region72: #{bert_classifier_forward.1} parent=39 // pred_fallthru
          _
        // Predicated region
        $region73: #{bert_classifier_forward.1} parent=39 // pred_check
          %p718 = pneg %p319
        $region74: #{bert_classifier_forward.1} parent=39 // pred_check_branch
          %720 = sbr.rel (%p718) target = $region76
        $region75: #{bert_classifier_forward.1} parent=39 // pred_region
          %p721 = scmp.lt.s32.totalorder %s45, 1
          %s722 = scalar_select %p721, %s45, 1
          %s723 = smul.addr %s722, 32
          %s724 = smul.addr %s723, 4
          %s725 = scalar_lea.vmem %s10, %s724
        $region76: #{bert_classifier_forward.1} parent=39 // pred_fallthru
          _
        // Predicated region
        $region77: #{bert_classifier_forward.1} parent=39 // pred_check
          %p726 = pneg %p345
        $region78: #{bert_classifier_forward.1} parent=39 // pred_check_branch
          %728 = sbr.rel (%p726) target = $region80
        $region79: #{bert_classifier_forward.1} parent=39 // pred_region
          %p729 = scmp.lt.s32.totalorder %s45, 1
          %s730 = scalar_select %p729, %s45, 1
          %s731 = smul.addr %s730, 2
          %s732 = scalar_lea.vmem %s11, %s731
        $region80: #{bert_classifier_forward.1} parent=39 // pred_fallthru
          _
        // Predicated region
        $region81: #{bert_classifier_forward.1} parent=39 // pred_check
          %p733 = pneg %p371
        $region82: #{bert_classifier_forward.1} parent=39 // pred_check_branch
          %735 = sbr.rel (%p733) target = $region84
        $region83: #{bert_classifier_forward.1} parent=39 // pred_region
          %s736 = sand.u32 %s37, 1
          %s737 = scalar_lea.sflag [#allocation9], %s736
          %s738 = sand.u32 %s361, 1
          %s739 = smul.addr %s738, 128
          %s740 = scalar_lea.vmem [#allocation8], %s739
          %s742 = ssub.s32 2048, 2048
          %743 = vsyncadd %s737, %s742
          %s744 = smul.addr %s45, 32
          %s745 = smul.addr %s744, 64
          %s746 = scalar_lea.hbm %s12, %s745
          %s747 = sshll.u32 %s740, 4
          %s748 = int_to_ptr.vmem [resolvable:$true] %s747
          %753 = dma.hbm_to_vmem [thread:$0]  %s746, 2048, %s748, %s737, 64, 64, 4
        $region84: #{bert_classifier_forward.1} parent=39 // pred_fallthru
          _
        // Predicated region
        $region85: #{bert_classifier_forward.1} parent=39 // pred_check
          %p754 = pneg %p397
        $region86: #{bert_classifier_forward.1} parent=39 // pred_check_branch
          %756 = sbr.rel (%p754) target = $region88
        $region87: #{bert_classifier_forward.1} parent=39 // pred_region
          %p757 = scmp.lt.s32.totalorder %s45, 1
          %s758 = scalar_select %p757, %s45, 1
          %s759 = scalar_lea.vmem %s13, %s758
        $region88: #{bert_classifier_forward.1} parent=39 // pred_fallthru
          _
        // Predicated region
        $region89: #{bert_classifier_forward.1} parent=39 // pred_check
          %p760 = pneg %p423
        $region90: #{bert_classifier_forward.1} parent=39 // pred_check_branch
          %762 = sbr.rel (%p760) target = $region92
        $region91: #{bert_classifier_forward.1} parent=39 // pred_region
          %s763 = sand.u32 %s37, 1
          %s764 = scalar_lea.sflag [#allocation9], %s763
          %s765 = sand.u32 %s413, 1
          %s766 = scalar_lea.vmem [#allocation10], %s765
          %s768 = ssub.s32 16, 16
          %769 = vsyncadd %s764, %s768
          %s770 = smul.addr %s45, 16
          %s771 = scalar_lea.hbm %s14, %s770
          %s773 = sshll.u32 %s766, 4
          %s774 = int_to_ptr.vmem [resolvable:$true] %s773
          %776 = dma.hbm_to_vmem [thread:$0]  %s771, 16, %s774, %s764
        $region92: #{bert_classifier_forward.1} parent=39 // pred_fallthru
          _
        // Predicated region
        $region93: #{bert_classifier_forward.1} parent=39 // pred_check
          %p777 = pneg %p449
        $region94: #{bert_classifier_forward.1} parent=39 // pred_check_branch
          %779 = sbr.rel (%p777) target = $region96
        $region95: #{bert_classifier_forward.1} parent=39 // pred_region
          %s780 = sand.u32 %s37, 1
          %s781 = scalar_lea.sflag [#allocation12], %s780
          %s782 = sand.u32 %s439, 1
          %s783 = scalar_lea.vmem [#allocation11], %s782
          %s785 = ssub.s32 16, 16
          %786 = vsyncadd %s781, %s785
          %s787 = smul.addr %s45, 16
          %s788 = scalar_lea.hbm %s15, %s787
          %s790 = sshll.u32 %s783, 4
          %s791 = int_to_ptr.vmem [resolvable:$true] %s790
          %793 = dma.hbm_to_vmem [thread:$0]  %s788, 16, %s791, %s781
        $region96: #{bert_classifier_forward.1} parent=39 // pred_fallthru
          _
      $region40: #{bert_classifier_forward.1} parent=5 // pred_fallthru
        _
      %p794 = scmp.le.s32.totalorder 1, %s37
      %p795 = scmp.lt.s32.totalorder %s37, 5
      %p796 = pnand %p794, %p795
      %p797 = pneg %p796
      // Predicated region
      $region97: #{bert_classifier_forward.1} parent=5 // pred_check
        _
      $region98: #{bert_classifier_forward.1} parent=5 // pred_check_branch
        %799 = sbr.rel (%p796) target = $region100
      $region99: #{bert_classifier_forward.1} parent=5 // pred_region
        %s800 = ssub.s32 %s37, 1
        // Predicated region
        $region101: #{bert_classifier_forward.1} parent=99 // pred_check
          %p801 = pneg %p143
        $region102: #{bert_classifier_forward.1} parent=99 // pred_check_branch
          %803 = sbr.rel (%p801) target = $region104
        $region103: #{bert_classifier_forward.1} parent=99 // pred_region
          %804 = dma.done [#allocation4], 16
        $region104: #{bert_classifier_forward.1} parent=99 // pred_fallthru
          _
        %s805 = sand.u32 %s42, 1
        %s806 = scalar_lea.sflag [#allocation6], %s805
        %s807 = sand.u32 %s156, 1
        %s808 = smul.addr %s807, 192
        %s809 = scalar_lea.vmem [#allocation5], %s808
        // Predicated region
        $region105: #{bert_classifier_forward.1} parent=99 // pred_check
          %p810 = pneg %p169
        $region106: #{bert_classifier_forward.1} parent=99 // pred_check_branch
          %812 = sbr.rel (%p810) target = $region108
        $region107: #{bert_classifier_forward.1} parent=99 // pred_region
          %813 = dma.done %s806, 3072
        $region108: #{bert_classifier_forward.1} parent=99 // pred_fallthru
          _
        %s814 = sand.u32 %s42, 1
        %s815 = scalar_lea.sflag [#allocation6], %s814
        %s816 = sand.u32 %s208, 1
        %s817 = smul.addr %s816, 64
        %s818 = scalar_lea.vmem [#allocation7], %s817
        // Predicated region
        $region109: #{bert_classifier_forward.1} parent=99 // pred_check
          %p819 = pneg %p221
        $region110: #{bert_classifier_forward.1} parent=99 // pred_check_branch
          %821 = sbr.rel (%p819) target = $region112
        $region111: #{bert_classifier_forward.1} parent=99 // pred_region
          %822 = dma.done %s815, 1024
        $region112: #{bert_classifier_forward.1} parent=99 // pred_fallthru
          _
        %s823 = sand.u32 %s42, 1
        %s824 = scalar_lea.sflag [#allocation9], %s823
        %s825 = sand.u32 %s364, 1
        %s826 = smul.addr %s825, 128
        %s827 = scalar_lea.vmem [#allocation8], %s826
        // Predicated region
        $region113: #{bert_classifier_forward.1} parent=99 // pred_check
          %p828 = pneg %p377
        $region114: #{bert_classifier_forward.1} parent=99 // pred_check_branch
          %830 = sbr.rel (%p828) target = $region116
        $region115: #{bert_classifier_forward.1} parent=99 // pred_region
          %831 = dma.done %s824, 2048
        $region116: #{bert_classifier_forward.1} parent=99 // pred_fallthru
          _
        %s832 = sand.u32 %s42, 1
        %s833 = scalar_lea.sflag [#allocation9], %s832
        %s834 = sand.u32 %s416, 1
        %s835 = scalar_lea.vmem [#allocation10], %s834
        // Predicated region
        $region117: #{bert_classifier_forward.1} parent=99 // pred_check
          %p836 = pneg %p429
        $region118: #{bert_classifier_forward.1} parent=99 // pred_check_branch
          %838 = sbr.rel (%p836) target = $region120
        $region119: #{bert_classifier_forward.1} parent=99 // pred_region
          %839 = dma.done %s833, 16
        $region120: #{bert_classifier_forward.1} parent=99 // pred_fallthru
          _
        %s840 = sand.u32 %s42, 1
        %s841 = scalar_lea.sflag [#allocation12], %s840
        %s842 = sand.u32 %s442, 1
        %s843 = scalar_lea.vmem [#allocation11], %s842
        // Predicated region
        $region121: #{bert_classifier_forward.1} parent=99 // pred_check
          %p844 = pneg %p455
        $region122: #{bert_classifier_forward.1} parent=99 // pred_check_branch
          %846 = sbr.rel (%p844) target = $region124
        $region123: #{bert_classifier_forward.1} parent=99 // pred_region
          %847 = dma.done %s841, 16
        $region124: #{bert_classifier_forward.1} parent=99 // pred_fallthru
          _
        // Predicated region
        $region125: #{bert_classifier_forward.1} parent=99 // pred_check
          %p848 = pneg %p476
        $region126: #{bert_classifier_forward.1} parent=99 // pred_check_branch
          %850 = sbr.rel (%p848) target = $region128
        $region127: #{bert_classifier_forward.1} parent=99 // pred_region
          %851 = dma.done [#allocation12], 1024
        $region128: #{bert_classifier_forward.1} parent=99 // pred_fallthru
          _
        // Predicated region
        $region129: #{bert_classifier_forward.1} parent=99 // pred_check
          %p852 = pneg %p497
        $region130: #{bert_classifier_forward.1} parent=99 // pred_check_branch
          %854 = sbr.rel (%p852) target = $region132
        $region131: #{bert_classifier_forward.1} parent=99 // pred_region
          %855 = dma.done [#allocation15], 16
        $region132: #{bert_classifier_forward.1} parent=99 // pred_fallthru
          _
        // Predicated region
        $region133: #{bert_classifier_forward.1} parent=99 // pred_check
          %p856 = pneg %p518
        $region134: #{bert_classifier_forward.1} parent=99 // pred_check_branch
          %858 = sbr.rel (%p856) target = $region136
        $region135: #{bert_classifier_forward.1} parent=99 // pred_region
          %859 = dma.done [#allocation15], 1024
        $region136: #{bert_classifier_forward.1} parent=99 // pred_fallthru
          _
        %p860 = scmp.lt.s32.totalorder %s46, 1
        %s861 = scalar_select %p860, %s46, 1
        %s862 = smul.addr %s861, 8
        %s863 = scalar_lea.vmem %s0, %s862
        %p864 = pneg %p75
        %p865 = pneg %p72
        %p866 = scmp.lt.s32.totalorder %s46, 1
        %s867 = scalar_select %p866, %s46, 1
        %s868 = scalar_lea.vmem %s1, %s867
        %p869 = pneg %p101
        %p870 = pneg %p98
        %p871 = pneg %p122
        %p872 = pneg %p119
        %p873 = pneg %p143
        %p874 = pneg %p140
        %s875 = sand.u32 %s42, 1
        %s876 = scalar_lea.sflag [#allocation6], %s875
        %s877 = sand.u32 %s156, 1
        %s878 = smul.addr %s877, 192
        %s879 = scalar_lea.vmem [#allocation5], %s878
        %p880 = pneg %p169
        %p881 = pneg %p166
        %p882 = scmp.lt.s32.totalorder %s47, 1
        %s883 = scalar_select %p882, %s47, 1
        %s884 = smul.addr %s883, 3
        %s885 = scalar_lea.vmem %s5, %s884
        %p886 = pneg %p195
        %p887 = pneg %p192
        %s888 = sand.u32 %s42, 1
        %s889 = scalar_lea.sflag [#allocation6], %s888
        %s890 = sand.u32 %s208, 1
        %s891 = smul.addr %s890, 64
        %s892 = scalar_lea.vmem [#allocation7], %s891
        %p893 = pneg %p221
        %p894 = pneg %p218
        %p895 = scmp.lt.s32.totalorder %s47, 1
        %s896 = scalar_select %p895, %s47, 1
        %s897 = scalar_lea.vmem %s7, %s896
        %p898 = pneg %p247
        %p899 = pneg %p244
        %p900 = scmp.lt.s32.totalorder %s47, 1
        %s901 = scalar_select %p900, %s47, 1
        %s902 = scalar_lea.vmem %s8, %s901
        %p903 = pneg %p273
        %p904 = pneg %p270
        %p905 = scmp.lt.s32.totalorder %s47, 1
        %s906 = scalar_select %p905, %s47, 1
        %s907 = scalar_lea.vmem %s9, %s906
        %p908 = pneg %p299
        %p909 = pneg %p296
        %p910 = scmp.lt.s32.totalorder %s47, 1
        %s911 = scalar_select %p910, %s47, 1
        %s912 = smul.addr %s911, 32
        %s913 = smul.addr %s912, 4
        %s914 = scalar_lea.vmem %s10, %s913
        %p915 = pneg %p325
        %p916 = pneg %p322
        %p917 = scmp.lt.s32.totalorder %s47, 1
        %s918 = scalar_select %p917, %s47, 1
        %s919 = smul.addr %s918, 2
        %s920 = scalar_lea.vmem %s11, %s919
        %p921 = pneg %p351
        %p922 = pneg %p348
        %s923 = sand.u32 %s42, 1
        %s924 = scalar_lea.sflag [#allocation9], %s923
        %s925 = sand.u32 %s364, 1
        %s926 = smul.addr %s925, 128
        %s927 = scalar_lea.vmem [#allocation8], %s926
        %p928 = pneg %p377
        %p929 = pneg %p374
        %p930 = scmp.lt.s32.totalorder %s47, 1
        %s931 = scalar_select %p930, %s47, 1
        %s932 = scalar_lea.vmem %s13, %s931
        %p933 = pneg %p403
        %p934 = pneg %p400
        %s935 = sand.u32 %s42, 1
        %s936 = scalar_lea.sflag [#allocation9], %s935
        %s937 = sand.u32 %s416, 1
        %s938 = scalar_lea.vmem [#allocation10], %s937
        %p939 = pneg %p429
        %p940 = pneg %p426
        %s941 = sand.u32 %s42, 1
        %s942 = scalar_lea.sflag [#allocation12], %s941
        %s943 = sand.u32 %s442, 1
        %s944 = scalar_lea.vmem [#allocation11], %s943
        %p945 = pneg %p455
        %p946 = pneg %p452
        %p947 = pneg %p476
        %p948 = pneg %p473
        %p949 = pneg %p497
        %p950 = pneg %p494
        %p951 = pneg %p518
        %p952 = pneg %p515
        %p953 = pneg %p539
        %p954 = pneg %p536
        %p955 = pneg %p565
        %p956 = pneg %p562
        %p957 = scmp.lt.s32.totalorder %s46, 1
        %s958 = scalar_select %p957, %s46, 1
        %s959 = scalar_lea.vmem %s20, %s958
        %p960 = scmp.lt.s32.totalorder %s46, 1
        %s961 = scalar_select %p960, %s46, 1
        %s962 = smul.addr %s961, 8
        %s963 = scalar_lea.vmem %s0, %s962
        %p964 = scmp.lt.s32.totalorder %s46, 1
        %s965 = scalar_select %p964, %s46, 1
        %s966 = scalar_lea.vmem %s1, %s965
        %p967 = scmp.lt.s32.totalorder %s47, 1
        %s968 = scalar_select %p967, %s47, 1
        %s969 = smul.addr %s968, 3
        %s970 = scalar_lea.vmem %s5, %s969
        %p971 = scmp.lt.s32.totalorder %s47, 1
        %s972 = scalar_select %p971, %s47, 1
        %s973 = scalar_lea.vmem %s7, %s972
        %p974 = scmp.lt.s32.totalorder %s47, 1
        %s975 = scalar_select %p974, %s47, 1
        %s976 = scalar_lea.vmem %s8, %s975
        %p977 = scmp.lt.s32.totalorder %s47, 1
        %s978 = scalar_select %p977, %s47, 1
        %s979 = scalar_lea.vmem %s9, %s978
        %p980 = scmp.lt.s32.totalorder %s47, 1
        %s981 = scalar_select %p980, %s47, 1
        %s982 = smul.addr %s981, 32
        %s983 = smul.addr %s982, 4
        %s984 = scalar_lea.vmem %s10, %s983
        %p985 = scmp.lt.s32.totalorder %s47, 1
        %s986 = scalar_select %p985, %s47, 1
        %s987 = smul.addr %s986, 2
        %s988 = scalar_lea.vmem %s11, %s987
        %p989 = scmp.lt.s32.totalorder %s47, 1
        %s990 = scalar_select %p989, %s47, 1
        %s991 = scalar_lea.vmem %s13, %s990
        %p992 = scmp.lt.s32.totalorder %s46, 1
        %s993 = scalar_select %p992, %s46, 1
        %s994 = scalar_lea.vmem %s20, %s993
        %p996 = scmp.eq.s32.totalorder %s47, 0
        // Predicated region
        $region137: #{bert_classifier_forward.1} parent=99 // pred_check
          %p997 = pneg %p996
        $region138: #{bert_classifier_forward.1} parent=99 // pred_check_branch
          %999 = sbr.rel (%p997) target = $region140
        $region139: #{bert_classifier_forward.1} parent=99 // pred_region
          %v1000 = vld [vmem:[%s963] sm:$0xff]
          %v1001 = vld [vmem:[%s2] sm:$0x1]
          %v1002 = vld [vmem:[#allocation3] sm:$0x1]
          %1003 = vadd.xlane.f32.xlu0 %v1000
          %v1004 = vpop.xlane.xlu0 %1003
          %v1005 = vrcp.pop 128.0
          %v1006 = vmul.f32 %v1004, %v1005
          %v1007 = vsub.f32 %v1000, %v1006
          %v1008 = vmul.f32 %v1007, %v1007
          %1009 = vadd.xlane.f32.xlu0 %v1008
          %v1010 = vpop.xlane.xlu0 %1009
          %v1011 = vmul.f32 %v1010, %v1005
          %v1012 = vadd.f32 %v1011, 1e-05
          %v1013 = vrsqrt.pop %v1012
          %v1014 = vmul.f32 %v1007, %v1013
          %v1016 = vlaneseq
          %v1017 = vshrl.u32 %v1016, 7
          %v1018 = vsub.s32 0, %v1017
          %v1019 = vrot.slane %v1001, %v1018
          %v1021 = vmul.f32 %v1014, %v1019
          %v1023 = vlaneseq
          %v1024 = vshrl.u32 %v1023, 7
          %v1025 = vsub.s32 0, %v1024
          %v1026 = vrot.slane %v1002, %v1025
          %v1028 = vadd.f32 %v1021, %v1026
          %1029 = vst [vmem:[#allocation2] sm:$0xff] %v1028
        $region140: #{bert_classifier_forward.1} parent=99 // pred_fallthru
          _
        %v1030 = vld [vmem:[#allocation2] sm:$0xff]
        %v1031 = vld [vmem:[%s966] sm:$0x1]
        %v1032 = vld [vmem:[%s809] sm:$0xff]
        %v1033 = vld [vmem:[%s809 + $0x8] sm:$0xf]
        %v1034 = vld [vmem:[%s809 + $0xc] sm:$0xff]
        %v1035 = vld [vmem:[%s809 + $0x14] sm:$0xf]
        %v1036 = vld [vmem:[%s809 + $0x18] sm:$0xff]
        %v1037 = vld [vmem:[%s809 + $0x20] sm:$0xf]
        %v1038 = vld [vmem:[%s809 + $0x24] sm:$0xff]
        %v1039 = vld [vmem:[%s809 + $0x2c] sm:$0xf]
        %v1040 = vld [vmem:[%s809 + $0x30] sm:$0xff]
        %v1041 = vld [vmem:[%s809 + $0x38] sm:$0xf]
        %v1042 = vld [vmem:[%s809 + $0x3c] sm:$0xff]
        %v1043 = vld [vmem:[%s809 + $0x44] sm:$0xf]
        %v1044 = vld [vmem:[%s809 + $0x48] sm:$0xff]
        %v1045 = vld [vmem:[%s809 + $0x50] sm:$0xf]
        %v1046 = vld [vmem:[%s809 + $0x54] sm:$0xff]
        %v1047 = vld [vmem:[%s809 + $0x5c] sm:$0xf]
        %v1048 = vld [vmem:[%s809 + $0x60] sm:$0xff]
        %v1049 = vld [vmem:[%s809 + $0x68] sm:$0xf]
        %v1050 = vld [vmem:[%s809 + $0x6c] sm:$0xff]
        %v1051 = vld [vmem:[%s809 + $0x74] sm:$0xf]
        %v1052 = vld [vmem:[%s809 + $0x78] sm:$0xff]
        %v1053 = vld [vmem:[%s809 + $0x80] sm:$0xf]
        %v1054 = vld [vmem:[%s809 + $0x84] sm:$0xff]
        %v1055 = vld [vmem:[%s809 + $0x8c] sm:$0xf]
        %v1056 = vld [vmem:[%s809 + $0x90] sm:$0xff]
        %v1057 = vld [vmem:[%s809 + $0x98] sm:$0xf]
        %v1058 = vld [vmem:[%s809 + $0x9c] sm:$0xff]
        %v1059 = vld [vmem:[%s809 + $0xa4] sm:$0xf]
        %v1060 = vld [vmem:[%s809 + $0xa8] sm:$0xff]
        %v1061 = vld [vmem:[%s809 + $0xb0] sm:$0xf]
        %v1062 = vld [vmem:[%s809 + $0xb4] sm:$0xff]
        %v1063 = vld [vmem:[%s809 + $0xbc] sm:$0xf]
        %v1064 = vpack.c.bf16 %v1030, %v1030
        %v1065 = vld [vmem:[%s970] sm:$0x7]
        %v1067 = vlaneseq
        %v1068 = vshrl.u32 %v1067, 7
        %v1069 = vsub.s32 0, %v1068
        %v1070 = vrot.slane %v1065, %v1069
        %v1071 = vlaneseq
        %v1072 = vshrl.u32 %v1071, 7
        %v1073 = vsub.s32 1, %v1072
        %v1074 = vrot.slane %v1065, %v1073
        %v1075 = vlaneseq
        %v1076 = vshrl.u32 %v1075, 7
        %v1077 = vsub.s32 2, %v1076
        %v1078 = vrot.slane %v1065, %v1077
        %v1114 = vunpack.c.l.b16 %v1032
        %v1115 = vunpack.c.h.b16 %v1032
        %v1116 = vunpack.c.l.b16 %v1033
        %v1117 = vunpack.c.l.b16 %v1034
        %v1118 = vunpack.c.h.b16 %v1034
        %v1119 = vunpack.c.l.b16 %v1035
        %v1120 = vunpack.c.l.b16 %v1036
        %v1121 = vunpack.c.h.b16 %v1036
        %v1122 = vunpack.c.l.b16 %v1037
        %v1123 = vunpack.c.l.b16 %v1038
        %v1124 = vunpack.c.h.b16 %v1038
        %v1125 = vunpack.c.l.b16 %v1039
        %v1126 = vunpack.c.l.b16 %v1040
        %v1127 = vunpack.c.h.b16 %v1040
        %v1128 = vunpack.c.l.b16 %v1041
        %v1129 = vunpack.c.l.b16 %v1042
        %v1130 = vunpack.c.h.b16 %v1042
        %v1131 = vunpack.c.l.b16 %v1043
        %v1132 = vunpack.c.l.b16 %v1044
        %v1133 = vunpack.c.h.b16 %v1044
        %v1134 = vunpack.c.l.b16 %v1045
        %v1135 = vunpack.c.l.b16 %v1046
        %v1136 = vunpack.c.h.b16 %v1046
        %v1137 = vunpack.c.l.b16 %v1047
        %v1138 = vunpack.c.l.b16 %v1048
        %v1139 = vunpack.c.h.b16 %v1048
        %v1140 = vunpack.c.l.b16 %v1049
        %v1141 = vunpack.c.l.b16 %v1050
        %v1142 = vunpack.c.h.b16 %v1050
        %v1143 = vunpack.c.l.b16 %v1051
        %v1144 = vunpack.c.l.b16 %v1052
        %v1145 = vunpack.c.h.b16 %v1052
        %v1146 = vunpack.c.l.b16 %v1053
        %v1147 = vunpack.c.l.b16 %v1054
        %v1148 = vunpack.c.h.b16 %v1054
        %v1149 = vunpack.c.l.b16 %v1055
        %v1150 = vunpack.c.l.b16 %v1056
        %v1151 = vunpack.c.h.b16 %v1056
        %v1152 = vunpack.c.l.b16 %v1057
        %v1153 = vunpack.c.l.b16 %v1058
        %v1154 = vunpack.c.h.b16 %v1058
        %v1155 = vunpack.c.l.b16 %v1059
        %v1156 = vunpack.c.l.b16 %v1060
        %v1157 = vunpack.c.h.b16 %v1060
        %v1158 = vunpack.c.l.b16 %v1061
        %v1159 = vunpack.c.l.b16 %v1062
        %v1160 = vunpack.c.h.b16 %v1062
        %v1161 = vunpack.c.l.b16 %v1063
        %v1162 = vpack.c.b16 %v1117, %v1114
        %v1163 = vpack.c.b16 %v1118, %v1115
        %v1164 = vpack.c.b16 %v1119, %v1116
        %v1165 = vpack.c.b16 %v1123, %v1120
        %v1166 = vpack.c.b16 %v1124, %v1121
        %v1167 = vpack.c.b16 %v1125, %v1122
        %v1168 = vpack.c.b16 %v1129, %v1126
        %v1169 = vpack.c.b16 %v1130, %v1127
        %v1170 = vpack.c.b16 %v1131, %v1128
        %v1171 = vpack.c.b16 %v1135, %v1132
        %v1172 = vpack.c.b16 %v1136, %v1133
        %v1173 = vpack.c.b16 %v1137, %v1134
        %v1174 = vpack.c.b16 %v1141, %v1138
        %v1175 = vpack.c.b16 %v1142, %v1139
        %v1176 = vpack.c.b16 %v1143, %v1140
        %v1177 = vpack.c.b16 %v1147, %v1144
        %v1178 = vpack.c.b16 %v1148, %v1145
        %v1179 = vpack.c.b16 %v1149, %v1146
        %v1180 = vpack.c.b16 %v1153, %v1150
        %v1181 = vpack.c.b16 %v1154, %v1151
        %v1182 = vpack.c.b16 %v1155, %v1152
        %v1183 = vpack.c.b16 %v1159, %v1156
        %v1184 = vpack.c.b16 %v1160, %v1157
        %v1185 = vpack.c.b16 %v1161, %v1158
        %1210 = vmatprep.subr.bf16.mxu0 %v1184
        %1211 = vmatpush1.bf16.msra.mxu0 %v1183
        %1212 = vmatprep.subr.bf16.mxu0 %v1181
        %1213 = vmatpush1.bf16.msra.mxu0 %v1180
        %1214 = vmatprep.subr.bf16.mxu0 %v1178
        %1215 = vmatpush1.bf16.msra.mxu0 %v1177
        %1216 = vmatprep.subr.bf16.mxu0 %v1175
        %1217 = vmatpush1.bf16.msra.mxu0 %v1174
        %1218 = vmatprep.subr.bf16.mxu0 %v1172
        %1219 = vmatpush1.bf16.msra.mxu0 %v1171
        %1220 = vmatprep.subr.bf16.mxu0 %v1169
        %1221 = vmatpush1.bf16.msra.mxu0 %v1168
        %1222 = vmatprep.subr.bf16.mxu0 %v1166
        %1223 = vmatpush1.bf16.msra.mxu0 %v1165
        %1224 = vmatprep.subr.bf16.mxu0 %v1163
        %1225 = vmatpush1.bf16.msra.mxu0 %v1162
        %1226 = vmatprep.subr.bf16.mxu0 0
        %1227 = vmatpush2.bf16.msra.mxu0 0
        %1228 = vmatprep.subr.bf16.mxu0 0
        %1229 = vmatpush2.bf16.msra.mxu0 0
        %1230 = vmatprep.subr.bf16.mxu0 0
        %1231 = vmatpush2.bf16.msra.mxu0 0
        %1232 = vmatprep.subr.bf16.mxu0 0
        %1233 = vmatpush2.bf16.msra.mxu0 0
        %1234 = vmatprep.subr.bf16.mxu0 0
        %1235 = vmatpush2.bf16.msra.mxu0 0
        %1236 = vmatprep.subr.bf16.mxu0 0
        %1237 = vmatpush2.bf16.msra.mxu0 0
        %1238 = vmatprep.subr.bf16.mxu0 0
        %1239 = vmatpush2.bf16.msra.mxu0 0
        %1240 = vmatprep.subr.bf16.mxu0 0
        %1241 = vmatpush2.bf16.msra.mxu0 0
        %1242 = vmatprep.mubr.bf16.mxu0 0
        %1243 = vmatmul.mubr.bf16.gmra.mxu0 %v1064
        %v1244 = vpop.f32.mrf.mxu0
        %v1245 = vadd.f32 %v1070, %v1244
        %v1246 = vpop.f32.mrf.mxu0
        %v1247 = vadd.f32 %v1074, %v1246
        %v1248 = vpop.f32.mrf.mxu0
        %v1249 = vpop.f32.mrf.mxu0
        %1250 = vdwg.mxu0
        %1251 = vmatprep.subr.bf16.mxu0 0
        %1252 = vmatpush1.bf16.msra.mxu0 %v1185
        %1253 = vmatprep.subr.bf16.mxu0 0
        %1254 = vmatpush1.bf16.msra.mxu0 %v1182
        %1255 = vmatprep.subr.bf16.mxu0 0
        %1256 = vmatpush1.bf16.msra.mxu0 %v1179
        %1257 = vmatprep.subr.bf16.mxu0 0
        %1258 = vmatpush1.bf16.msra.mxu0 %v1176
        %1259 = vmatprep.subr.bf16.mxu0 0
        %1260 = vmatpush1.bf16.msra.mxu0 %v1173
        %1261 = vmatprep.subr.bf16.mxu0 0
        %1262 = vmatpush1.bf16.msra.mxu0 %v1170
        %1263 = vmatprep.subr.bf16.mxu0 0
        %1264 = vmatpush1.bf16.msra.mxu0 %v1167
        %1265 = vmatprep.subr.bf16.mxu0 0
        %1266 = vmatpush1.bf16.msra.mxu0 %v1164
        %1267 = vmatprep.subr.bf16.mxu0 0
        %1268 = vmatpush2.bf16.msra.mxu0 0
        %1269 = vmatprep.subr.bf16.mxu0 0
        %1270 = vmatpush2.bf16.msra.mxu0 0
        %1271 = vmatprep.subr.bf16.mxu0 0
        %1272 = vmatpush2.bf16.msra.mxu0 0
        %1273 = vmatprep.subr.bf16.mxu0 0
        %1274 = vmatpush2.bf16.msra.mxu0 0
        %1275 = vmatprep.subr.bf16.mxu0 0
        %1276 = vmatpush2.bf16.msra.mxu0 0
        %1277 = vmatprep.subr.bf16.mxu0 0
        %1278 = vmatpush2.bf16.msra.mxu0 0
        %1279 = vmatprep.subr.bf16.mxu0 0
        %1280 = vmatpush2.bf16.msra.mxu0 0
        %1281 = vmatprep.subr.bf16.mxu0 0
        %1282 = vmatpush2.bf16.msra.mxu0 0
        %1283 = vmatprep.mubr.bf16.mxu0 0
        %1284 = vmatmul.mubr.bf16.gmra.mxu0 %v1064
        %v1285 = vpop.f32.mrf.mxu0
        %v1286 = vadd.f32 %v1078, %v1285
        %v1287 = vpop.f32.mrf.mxu0
        %v1288 = vpop.f32.mrf.mxu0
        %v1289 = vpop.f32.mrf.mxu0
        %1290 = vdwg.mxu0
        %v1291 = vpack.c.bf16 %v1245, %v1245
        %v1292 = vpack.c.bf16 %v1247, %v1247
        %v1293 = vpack.c.bf16 %v1286, %v1286
        %vm1294 = vcmask 523264
        %v1296 = vsel %vm1294, %v1291, 0
        %v1299 = vsel %vm1294, %v1292, 0
        %1301 = vmatprep.subr.bf16.mxu0 0
        %1302 = vmatpush1.bf16.xpose.msra.mxu0 0
        %1303 = vmatprep.subr.bf16.mxu0 0
        %1304 = vmatpush1.bf16.xpose.msra.mxu0 0
        %1305 = vmatprep.subr.bf16.mxu0 0
        %1306 = vmatpush1.bf16.xpose.msra.mxu0 0
        %1307 = vmatprep.subr.bf16.mxu0 0
        %1308 = vmatpush1.bf16.xpose.msra.mxu0 0
        %1309 = vmatprep.subr.bf16.mxu0 0
        %1310 = vmatpush1.bf16.xpose.msra.mxu0 0
        %1311 = vmatprep.subr.bf16.mxu0 0
        %1312 = vmatpush1.bf16.xpose.msra.mxu0 0
        %1313 = vmatprep.subr.bf16.mxu0 0
        %1314 = vmatpush1.bf16.xpose.msra.mxu0 0
        %1315 = vmatprep.subr.bf16.mxu0 0
        %1316 = vmatpush1.bf16.xpose.msra.mxu0 %v1299
        %1317 = vmatprep.subr.bf16.mxu0 0
        %1318 = vmatpush2.bf16.xpose.msra.mxu0 0
        %1319 = vmatprep.subr.bf16.mxu0 0
        %1320 = vmatpush2.bf16.xpose.msra.mxu0 0
        %1321 = vmatprep.subr.bf16.mxu0 0
        %1322 = vmatpush2.bf16.xpose.msra.mxu0 0
        %1323 = vmatprep.subr.bf16.mxu0 0
        %1324 = vmatpush2.bf16.xpose.msra.mxu0 0
        %1325 = vmatprep.subr.bf16.mxu0 0
        %1326 = vmatpush2.bf16.xpose.msra.mxu0 0
        %1327 = vmatprep.subr.bf16.mxu0 0
        %1328 = vmatpush2.bf16.xpose.msra.mxu0 0
        %1329 = vmatprep.subr.bf16.mxu0 0
        %1330 = vmatpush2.bf16.xpose.msra.mxu0 0
        %1331 = vmatprep.subr.bf16.mxu0 0
        %1332 = vmatpush2.bf16.xpose.msra.mxu0 0
        %1333 = vmatprep.mubr.bf16.mxu0 0
        %1334 = vmatmul.mubr.bf16.gmra.mxu0 %v1296
        %v1335 = vpop.f32.mrf.mxu0
        %v1336 = vadd.f32 0.0, %v1335
        %v1337 = vpop.f32.mrf.mxu0
        %v1338 = vpop.f32.mrf.mxu0
        %v1339 = vpop.f32.mrf.mxu0
        %1340 = vdwg.mxu0
        %v1341 = vmul.f32 %v1336, 0.125
        %v1343 = vlaneseq
        %v1344 = vshrl.u32 %v1343, 7
        %v1345 = vsub.s32 0, %v1344
        %v1346 = vrot.slane %v1031, %v1345
        %v1348 = vadd.f32 %v1341, %v1346
        %vm1349 = vcmask 64512
        %v1350 = vsel %vm1349, %v1348, -inf
        %1351 = vmax.xlane.f32.xlu0 %v1350
        %v1352 = vpop.xlane.xlu0 %1351
        %v1353 = vsub.f32 %v1348, %v1352
        %v1354 = vmul.f32 %v1353, 1.442695
        %v1355 = vpow.pop %v1354
        %v1356 = vsel %vm1349, %v1355, 0.0
        %1357 = vadd.xlane.f32.xlu0 %v1356
        %v1358 = vpop.xlane.xlu0 %1357
        %v1359 = vrcp.pop %v1358
        %v1360 = vmul.f32 %v1355, %v1359
        %v1361 = vpack.c.bf16 %v1360, %v1360
        %v1363 = vsel %vm1349, %v1361, 0
        %vm1365 = vcmask 1043456
        %v1367 = vsel %vm1365, %v1293, 0
        %1369 = vmatprep.subr.bf16.mxu0 0
        %1370 = vmatpush1.bf16.msra.mxu0 0
        %1371 = vmatprep.subr.bf16.mxu0 0
        %1372 = vmatpush1.bf16.msra.mxu0 0
        %1373 = vmatprep.subr.bf16.mxu0 0
        %1374 = vmatpush1.bf16.msra.mxu0 0
        %1375 = vmatprep.subr.bf16.mxu0 0
        %1376 = vmatpush1.bf16.msra.mxu0 0
        %1377 = vmatprep.subr.bf16.mxu0 0
        %1378 = vmatpush1.bf16.msra.mxu0 0
        %1379 = vmatprep.subr.bf16.mxu0 0
        %1380 = vmatpush1.bf16.msra.mxu0 0
        %1381 = vmatprep.subr.bf16.mxu0 0
        %1382 = vmatpush1.bf16.msra.mxu0 0
        %1383 = vmatprep.subr.bf16.mxu0 0
        %1384 = vmatpush1.bf16.msra.mxu0 %v1367
        %1385 = vmatprep.subr.bf16.mxu0 0
        %1386 = vmatpush2.bf16.msra.mxu0 0
        %1387 = vmatprep.subr.bf16.mxu0 0
        %1388 = vmatpush2.bf16.msra.mxu0 0
        %1389 = vmatprep.subr.bf16.mxu0 0
        %1390 = vmatpush2.bf16.msra.mxu0 0
        %1391 = vmatprep.subr.bf16.mxu0 0
        %1392 = vmatpush2.bf16.msra.mxu0 0
        %1393 = vmatprep.subr.bf16.mxu0 0
        %1394 = vmatpush2.bf16.msra.mxu0 0
        %1395 = vmatprep.subr.bf16.mxu0 0
        %1396 = vmatpush2.bf16.msra.mxu0 0
        %1397 = vmatprep.subr.bf16.mxu0 0
        %1398 = vmatpush2.bf16.msra.mxu0 0
        %1399 = vmatprep.subr.bf16.mxu0 0
        %1400 = vmatpush2.bf16.msra.mxu0 0
        %1401 = vmatprep.mubr.bf16.mxu0 0
        %1402 = vmatmul.mubr.bf16.gmra.mxu0 %v1363
        %v1403 = vpop.f32.mrf.mxu0
        %v1404 = vadd.f32 0.0, %v1403
        %v1405 = vpop.f32.mrf.mxu0
        %v1406 = vpop.f32.mrf.mxu0
        %v1407 = vpop.f32.mrf.mxu0
        %1408 = vdwg.mxu0
        %1410 = vrot.lane.b32.xlu0 %v1291, 64
        %v1411 = vpop.permute.xlu0 %1410
        %1413 = vrot.lane.b32.xlu0 %v1292, 64
        %v1414 = vpop.permute.xlu0 %1413
        %v1416 = vsel %vm1294, %v1411, 0
        %v1419 = vsel %vm1294, %v1414, 0
        %1421 = vmatprep.subr.bf16.mxu0 0
        %1422 = vmatpush1.bf16.xpose.msra.mxu0 0
        %1423 = vmatprep.subr.bf16.mxu0 0
        %1424 = vmatpush1.bf16.xpose.msra.mxu0 0
        %1425 = vmatprep.subr.bf16.mxu0 0
        %1426 = vmatpush1.bf16.xpose.msra.mxu0 0
        %1427 = vmatprep.subr.bf16.mxu0 0
        %1428 = vmatpush1.bf16.xpose.msra.mxu0 0
        %1429 = vmatprep.subr.bf16.mxu0 0
        %1430 = vmatpush1.bf16.xpose.msra.mxu0 0
        %1431 = vmatprep.subr.bf16.mxu0 0
        %1432 = vmatpush1.bf16.xpose.msra.mxu0 0
        %1433 = vmatprep.subr.bf16.mxu0 0
        %1434 = vmatpush1.bf16.xpose.msra.mxu0 0
        %1435 = vmatprep.subr.bf16.mxu0 0
        %1436 = vmatpush1.bf16.xpose.msra.mxu0 %v1419
        %1437 = vmatprep.subr.bf16.mxu0 0
        %1438 = vmatpush2.bf16.xpose.msra.mxu0 0
        %1439 = vmatprep.subr.bf16.mxu0 0
        %1440 = vmatpush2.bf16.xpose.msra.mxu0 0
        %1441 = vmatprep.subr.bf16.mxu0 0
        %1442 = vmatpush2.bf16.xpose.msra.mxu0 0
        %1443 = vmatprep.subr.bf16.mxu0 0
        %1444 = vmatpush2.bf16.xpose.msra.mxu0 0
        %1445 = vmatprep.subr.bf16.mxu0 0
        %1446 = vmatpush2.bf16.xpose.msra.mxu0 0
        %1447 = vmatprep.subr.bf16.mxu0 0
        %1448 = vmatpush2.bf16.xpose.msra.mxu0 0
        %1449 = vmatprep.subr.bf16.mxu0 0
        %1450 = vmatpush2.bf16.xpose.msra.mxu0 0
        %1451 = vmatprep.subr.bf16.mxu0 0
        %1452 = vmatpush2.bf16.xpose.msra.mxu0 0
        %1453 = vmatprep.mubr.bf16.mxu0 0
        %1454 = vmatmul.mubr.bf16.gmra.mxu0 %v1416
        %v1455 = vpop.f32.mrf.mxu0
        %v1456 = vadd.f32 0.0, %v1455
        %v1457 = vpop.f32.mrf.mxu0
        %v1458 = vpop.f32.mrf.mxu0
        %v1459 = vpop.f32.mrf.mxu0
        %1460 = vdwg.mxu0
        %v1461 = vmul.f32 %v1456, 0.125
        %v1462 = vadd.f32 %v1461, %v1346
        %v1463 = vsel %vm1349, %v1462, -inf
        %1464 = vmax.xlane.f32.xlu0 %v1463
        %v1465 = vpop.xlane.xlu0 %1464
        %v1466 = vsub.f32 %v1462, %v1465
        %v1467 = vmul.f32 %v1466, 1.442695
        %v1468 = vpow.pop %v1467
        %v1469 = vsel %vm1349, %v1468, 0.0
        %1470 = vadd.xlane.f32.xlu0 %v1469
        %v1471 = vpop.xlane.xlu0 %1470
        %v1472 = vrcp.pop %v1471
        %v1473 = vmul.f32 %v1468, %v1472
        %v1474 = vpack.c.bf16 %v1473, %v1473
        %1476 = vrot.lane.b32.xlu0 %v1293, 64
        %v1477 = vpop.permute.xlu0 %1476
        %v1479 = vsel %vm1349, %v1474, 0
        %v1482 = vsel %vm1365, %v1477, 0
        %1484 = vmatprep.subr.bf16.mxu0 0
        %1485 = vmatpush1.bf16.msra.mxu0 0
        %1486 = vmatprep.subr.bf16.mxu0 0
        %1487 = vmatpush1.bf16.msra.mxu0 0
        %1488 = vmatprep.subr.bf16.mxu0 0
        %1489 = vmatpush1.bf16.msra.mxu0 0
        %1490 = vmatprep.subr.bf16.mxu0 0
        %1491 = vmatpush1.bf16.msra.mxu0 0
        %1492 = vmatprep.subr.bf16.mxu0 0
        %1493 = vmatpush1.bf16.msra.mxu0 0
        %1494 = vmatprep.subr.bf16.mxu0 0
        %1495 = vmatpush1.bf16.msra.mxu0 0
        %1496 = vmatprep.subr.bf16.mxu0 0
        %1497 = vmatpush1.bf16.msra.mxu0 0
        %1498 = vmatprep.subr.bf16.mxu0 0
        %1499 = vmatpush1.bf16.msra.mxu0 %v1482
        %1500 = vmatprep.subr.bf16.mxu0 0
        %1501 = vmatpush2.bf16.msra.mxu0 0
        %1502 = vmatprep.subr.bf16.mxu0 0
        %1503 = vmatpush2.bf16.msra.mxu0 0
        %1504 = vmatprep.subr.bf16.mxu0 0
        %1505 = vmatpush2.bf16.msra.mxu0 0
        %1506 = vmatprep.subr.bf16.mxu0 0
        %1507 = vmatpush2.bf16.msra.mxu0 0
        %1508 = vmatprep.subr.bf16.mxu0 0
        %1509 = vmatpush2.bf16.msra.mxu0 0
        %1510 = vmatprep.subr.bf16.mxu0 0
        %1511 = vmatpush2.bf16.msra.mxu0 0
        %1512 = vmatprep.subr.bf16.mxu0 0
        %1513 = vmatpush2.bf16.msra.mxu0 0
        %1514 = vmatprep.subr.bf16.mxu0 0
        %1515 = vmatpush2.bf16.msra.mxu0 0
        %1516 = vmatprep.mubr.bf16.mxu0 0
        %1517 = vmatmul.mubr.bf16.gmra.mxu0 %v1479
        %v1518 = vpop.f32.mrf.mxu0
        %v1519 = vadd.f32 0.0, %v1518
        %v1520 = vpop.f32.mrf.mxu0
        %v1521 = vpop.f32.mrf.mxu0
        %v1522 = vpop.f32.mrf.mxu0
        %1523 = vdwg.mxu0
        %1525 = vrot.lane.b32.xlu0 %v1519, 64
        %v1526 = vpop.permute.xlu0 %1525
        %v1528 = vsel %vm1294, %v1404, %v1526
        %v1529 = vld [vmem:[%s818] sm:$0xf]
        %v1530 = vld [vmem:[%s818 + $0x4] sm:$0xf]
        %v1531 = vld [vmem:[%s818 + $0x8] sm:$0xf]
        %v1532 = vld [vmem:[%s818 + $0xc] sm:$0xf]
        %v1533 = vld [vmem:[%s818 + $0x10] sm:$0xf]
        %v1534 = vld [vmem:[%s818 + $0x14] sm:$0xf]
        %v1535 = vld [vmem:[%s818 + $0x18] sm:$0xf]
        %v1536 = vld [vmem:[%s818 + $0x1c] sm:$0xf]
        %v1537 = vld [vmem:[%s818 + $0x20] sm:$0xf]
        %v1538 = vld [vmem:[%s818 + $0x24] sm:$0xf]
        %v1539 = vld [vmem:[%s818 + $0x28] sm:$0xf]
        %v1540 = vld [vmem:[%s818 + $0x2c] sm:$0xf]
        %v1541 = vld [vmem:[%s818 + $0x30] sm:$0xf]
        %v1542 = vld [vmem:[%s818 + $0x34] sm:$0xf]
        %v1543 = vld [vmem:[%s818 + $0x38] sm:$0xf]
        %v1544 = vld [vmem:[%s818 + $0x3c] sm:$0xf]
        %v1545 = vpack.c.bf16 %v1528, %v1528
        %v1546 = vld [vmem:[%s973] sm:$0x1]
        %v1548 = vlaneseq
        %v1549 = vshrl.u32 %v1548, 7
        %v1550 = vsub.s32 0, %v1549
        %v1551 = vrot.slane %v1546, %v1550
        %v1569 = vunpack.c.l.b16 %v1529
        %v1570 = vunpack.c.l.b16 %v1530
        %v1571 = vunpack.c.l.b16 %v1531
        %v1572 = vunpack.c.l.b16 %v1532
        %v1573 = vunpack.c.l.b16 %v1533
        %v1574 = vunpack.c.l.b16 %v1534
        %v1575 = vunpack.c.l.b16 %v1535
        %v1576 = vunpack.c.l.b16 %v1536
        %v1577 = vunpack.c.l.b16 %v1537
        %v1578 = vunpack.c.l.b16 %v1538
        %v1579 = vunpack.c.l.b16 %v1539
        %v1580 = vunpack.c.l.b16 %v1540
        %v1581 = vunpack.c.l.b16 %v1541
        %v1582 = vunpack.c.l.b16 %v1542
        %v1583 = vunpack.c.l.b16 %v1543
        %v1584 = vunpack.c.l.b16 %v1544
        %v1585 = vpack.c.b16 %v1570, %v1569
        %v1586 = vpack.c.b16 %v1572, %v1571
        %v1587 = vpack.c.b16 %v1574, %v1573
        %v1588 = vpack.c.b16 %v1576, %v1575
        %v1589 = vpack.c.b16 %v1578, %v1577
        %v1590 = vpack.c.b16 %v1580, %v1579
        %v1591 = vpack.c.b16 %v1582, %v1581
        %v1592 = vpack.c.b16 %v1584, %v1583
        %1601 = vmatprep.subr.bf16.mxu0 0
        %1602 = vmatpush1.bf16.msra.mxu0 %v1592
        %1603 = vmatprep.subr.bf16.mxu0 0
        %1604 = vmatpush1.bf16.msra.mxu0 %v1591
        %1605 = vmatprep.subr.bf16.mxu0 0
        %1606 = vmatpush1.bf16.msra.mxu0 %v1590
        %1607 = vmatprep.subr.bf16.mxu0 0
        %1608 = vmatpush1.bf16.msra.mxu0 %v1589
        %1609 = vmatprep.subr.bf16.mxu0 0
        %1610 = vmatpush1.bf16.msra.mxu0 %v1588
        %1611 = vmatprep.subr.bf16.mxu0 0
        %1612 = vmatpush1.bf16.msra.mxu0 %v1587
        %1613 = vmatprep.subr.bf16.mxu0 0
        %1614 = vmatpush1.bf16.msra.mxu0 %v1586
        %1615 = vmatprep.subr.bf16.mxu0 0
        %1616 = vmatpush1.bf16.msra.mxu0 %v1585
        %1617 = vmatprep.subr.bf16.mxu0 0
        %1618 = vmatpush2.bf16.msra.mxu0 0
        %1619 = vmatprep.subr.bf16.mxu0 0
        %1620 = vmatpush2.bf16.msra.mxu0 0
        %1621 = vmatprep.subr.bf16.mxu0 0
        %1622 = vmatpush2.bf16.msra.mxu0 0
        %1623 = vmatprep.subr.bf16.mxu0 0
        %1624 = vmatpush2.bf16.msra.mxu0 0
        %1625 = vmatprep.subr.bf16.mxu0 0
        %1626 = vmatpush2.bf16.msra.mxu0 0
        %1627 = vmatprep.subr.bf16.mxu0 0
        %1628 = vmatpush2.bf16.msra.mxu0 0
        %1629 = vmatprep.subr.bf16.mxu0 0
        %1630 = vmatpush2.bf16.msra.mxu0 0
        %1631 = vmatprep.subr.bf16.mxu0 0
        %1632 = vmatpush2.bf16.msra.mxu0 0
        %1633 = vmatprep.mubr.bf16.mxu0 0
        %1634 = vmatmul.mubr.bf16.gmra.mxu0 %v1545
        %v1635 = vpop.f32.mrf.mxu0
        %v1636 = vadd.f32 %v1551, %v1635
        %v1637 = vpop.f32.mrf.mxu0
        %v1638 = vpop.f32.mrf.mxu0
        %v1639 = vpop.f32.mrf.mxu0
        %1640 = vdwg.mxu0
        %v1641 = vadd.f32 %v1636, %v1030
        %v1642 = vld [vmem:[%s976] sm:$0x1]
        %v1643 = vld [vmem:[%s979] sm:$0x1]
        %1644 = vadd.xlane.f32.xlu0 %v1641
        %v1645 = vpop.xlane.xlu0 %1644
        %v1646 = vrcp.pop 128.0
        %v1647 = vmul.f32 %v1645, %v1646
        %v1648 = vsub.f32 %v1641, %v1647
        %v1649 = vmul.f32 %v1648, %v1648
        %1650 = vadd.xlane.f32.xlu0 %v1649
        %v1651 = vpop.xlane.xlu0 %1650
        %v1652 = vmul.f32 %v1651, %v1646
        %v1653 = vadd.f32 %v1652, 1e-05
        %v1654 = vrsqrt.pop %v1653
        %v1655 = vmul.f32 %v1648, %v1654
        %v1657 = vlaneseq
        %v1658 = vshrl.u32 %v1657, 7
        %v1659 = vsub.s32 0, %v1658
        %v1660 = vrot.slane %v1642, %v1659
        %v1662 = vmul.f32 %v1655, %v1660
        %v1664 = vlaneseq
        %v1665 = vshrl.u32 %v1664, 7
        %v1666 = vsub.s32 0, %v1665
        %v1667 = vrot.slane %v1643, %v1666
        %v1669 = vadd.f32 %v1662, %v1667
        %v1670 = vld [vmem:[%s984] sm:$0xff]
        %v1671 = vld [vmem:[%s984 + $0x8] sm:$0xff]
        %v1672 = vld [vmem:[%s984 + $0x10] sm:$0xff]
        %v1673 = vld [vmem:[%s984 + $0x18] sm:$0xff]
        %v1674 = vld [vmem:[%s984 + $0x20] sm:$0xff]
        %v1675 = vld [vmem:[%s984 + $0x28] sm:$0xff]
        %v1676 = vld [vmem:[%s984 + $0x30] sm:$0xff]
        %v1677 = vld [vmem:[%s984 + $0x38] sm:$0xff]
        %v1678 = vld [vmem:[%s984 + $0x40] sm:$0xff]
        %v1679 = vld [vmem:[%s984 + $0x48] sm:$0xff]
        %v1680 = vld [vmem:[%s984 + $0x50] sm:$0xff]
        %v1681 = vld [vmem:[%s984 + $0x58] sm:$0xff]
        %v1682 = vld [vmem:[%s984 + $0x60] sm:$0xff]
        %v1683 = vld [vmem:[%s984 + $0x68] sm:$0xff]
        %v1684 = vld [vmem:[%s984 + $0x70] sm:$0xff]
        %v1685 = vld [vmem:[%s984 + $0x78] sm:$0xff]
        %v1686 = vpack.c.bf16 %v1669, %v1669
        %v1687 = vld [vmem:[%s988] sm:$0x3]
        %v1689 = vlaneseq
        %v1690 = vshrl.u32 %v1689, 7
        %v1691 = vsub.s32 0, %v1690
        %v1692 = vrot.slane %v1687, %v1691
        %v1693 = vlaneseq
        %v1694 = vshrl.u32 %v1693, 7
        %v1695 = vsub.s32 1, %v1694
        %v1696 = vrot.slane %v1687, %v1695
        %v1715 = vunpack.c.l.b16 %v1670
        %v1716 = vunpack.c.h.b16 %v1670
        %v1717 = vunpack.c.l.b16 %v1671
        %v1718 = vunpack.c.h.b16 %v1671
        %v1719 = vunpack.c.l.b16 %v1672
        %v1720 = vunpack.c.h.b16 %v1672
        %v1721 = vunpack.c.l.b16 %v1673
        %v1722 = vunpack.c.h.b16 %v1673
        %v1723 = vunpack.c.l.b16 %v1674
        %v1724 = vunpack.c.h.b16 %v1674
        %v1725 = vunpack.c.l.b16 %v1675
        %v1726 = vunpack.c.h.b16 %v1675
        %v1727 = vunpack.c.l.b16 %v1676
        %v1728 = vunpack.c.h.b16 %v1676
        %v1729 = vunpack.c.l.b16 %v1677
        %v1730 = vunpack.c.h.b16 %v1677
        %v1731 = vunpack.c.l.b16 %v1678
        %v1732 = vunpack.c.h.b16 %v1678
        %v1733 = vunpack.c.l.b16 %v1679
        %v1734 = vunpack.c.h.b16 %v1679
        %v1735 = vunpack.c.l.b16 %v1680
        %v1736 = vunpack.c.h.b16 %v1680
        %v1737 = vunpack.c.l.b16 %v1681
        %v1738 = vunpack.c.h.b16 %v1681
        %v1739 = vunpack.c.l.b16 %v1682
        %v1740 = vunpack.c.h.b16 %v1682
        %v1741 = vunpack.c.l.b16 %v1683
        %v1742 = vunpack.c.h.b16 %v1683
        %v1743 = vunpack.c.l.b16 %v1684
        %v1744 = vunpack.c.h.b16 %v1684
        %v1745 = vunpack.c.l.b16 %v1685
        %v1746 = vunpack.c.h.b16 %v1685
        %v1747 = vpack.c.b16 %v1717, %v1715
        %v1748 = vpack.c.b16 %v1718, %v1716
        %v1749 = vpack.c.b16 %v1721, %v1719
        %v1750 = vpack.c.b16 %v1722, %v1720
        %v1751 = vpack.c.b16 %v1725, %v1723
        %v1752 = vpack.c.b16 %v1726, %v1724
        %v1753 = vpack.c.b16 %v1729, %v1727
        %v1754 = vpack.c.b16 %v1730, %v1728
        %v1755 = vpack.c.b16 %v1733, %v1731
        %v1756 = vpack.c.b16 %v1734, %v1732
        %v1757 = vpack.c.b16 %v1737, %v1735
        %v1758 = vpack.c.b16 %v1738, %v1736
        %v1759 = vpack.c.b16 %v1741, %v1739
        %v1760 = vpack.c.b16 %v1742, %v1740
        %v1761 = vpack.c.b16 %v1745, %v1743
        %v1762 = vpack.c.b16 %v1746, %v1744
        %1779 = vmatprep.subr.bf16.mxu0 %v1762
        %1780 = vmatpush1.bf16.msra.mxu0 %v1761
        %1781 = vmatprep.subr.bf16.mxu0 %v1760
        %1782 = vmatpush1.bf16.msra.mxu0 %v1759
        %1783 = vmatprep.subr.bf16.mxu0 %v1758
        %1784 = vmatpush1.bf16.msra.mxu0 %v1757
        %1785 = vmatprep.subr.bf16.mxu0 %v1756
        %1786 = vmatpush1.bf16.msra.mxu0 %v1755
        %1787 = vmatprep.subr.bf16.mxu0 %v1754
        %1788 = vmatpush1.bf16.msra.mxu0 %v1753
        %1789 = vmatprep.subr.bf16.mxu0 %v1752
        %1790 = vmatpush1.bf16.msra.mxu0 %v1751
        %1791 = vmatprep.subr.bf16.mxu0 %v1750
        %1792 = vmatpush1.bf16.msra.mxu0 %v1749
        %1793 = vmatprep.subr.bf16.mxu0 %v1748
        %1794 = vmatpush1.bf16.msra.mxu0 %v1747
        %1795 = vmatprep.subr.bf16.mxu0 0
        %1796 = vmatpush2.bf16.msra.mxu0 0
        %1797 = vmatprep.subr.bf16.mxu0 0
        %1798 = vmatpush2.bf16.msra.mxu0 0
        %1799 = vmatprep.subr.bf16.mxu0 0
        %1800 = vmatpush2.bf16.msra.mxu0 0
        %1801 = vmatprep.subr.bf16.mxu0 0
        %1802 = vmatpush2.bf16.msra.mxu0 0
        %1803 = vmatprep.subr.bf16.mxu0 0
        %1804 = vmatpush2.bf16.msra.mxu0 0
        %1805 = vmatprep.subr.bf16.mxu0 0
        %1806 = vmatpush2.bf16.msra.mxu0 0
        %1807 = vmatprep.subr.bf16.mxu0 0
        %1808 = vmatpush2.bf16.msra.mxu0 0
        %1809 = vmatprep.subr.bf16.mxu0 0
        %1810 = vmatpush2.bf16.msra.mxu0 0
        %1811 = vmatprep.mubr.bf16.mxu0 0
        %1812 = vmatmul.mubr.bf16.gmra.mxu0 %v1686
        %v1813 = vpop.f32.mrf.mxu0
        %v1814 = vadd.f32 %v1692, %v1813
        %v1815 = vpop.f32.mrf.mxu0
        %v1816 = vadd.f32 %v1696, %v1815
        %v1817 = vpop.f32.mrf.mxu0
        %v1818 = vpop.f32.mrf.mxu0
        %1819 = vdwg.mxu0
        %v1820 = vmul.f32 %v1814, 0.5
        %v1821 = vmul.f32 %v1816, 0.5
        %v1822 = vmul.f32 %v1814, 0.044715
        %v1823 = vmul.f32 %v1816, 0.044715
        %v1824 = vmul.f32 %v1822, %v1814
        %v1825 = vmul.f32 %v1823, %v1816
        %v1826 = vmul.f32 %v1824, %v1814
        %v1827 = vmul.f32 %v1825, %v1816
        %v1828 = vadd.f32 %v1814, %v1826
        %v1829 = vadd.f32 %v1816, %v1827
        %v1830 = vmul.f32 %v1828, 0.7978846
        %v1831 = vmul.f32 %v1829, 0.7978846
        %v1832 = vtanh.pop %v1830
        %v1833 = vtanh.pop %v1831
        %v1834 = vadd.f32 %v1832, 1.0
        %v1835 = vadd.f32 %v1833, 1.0
        %v1836 = vmul.f32 %v1820, %v1834
        %v1837 = vmul.f32 %v1821, %v1835
        %v1838 = vld [vmem:[%s827] sm:$0xf]
        %v1839 = vld [vmem:[%s827 + $0x4] sm:$0xf]
        %v1840 = vld [vmem:[%s827 + $0x8] sm:$0xf]
        %v1841 = vld [vmem:[%s827 + $0xc] sm:$0xf]
        %v1842 = vld [vmem:[%s827 + $0x10] sm:$0xf]
        %v1843 = vld [vmem:[%s827 + $0x14] sm:$0xf]
        %v1844 = vld [vmem:[%s827 + $0x18] sm:$0xf]
        %v1845 = vld [vmem:[%s827 + $0x1c] sm:$0xf]
        %v1846 = vld [vmem:[%s827 + $0x20] sm:$0xf]
        %v1847 = vld [vmem:[%s827 + $0x24] sm:$0xf]
        %v1848 = vld [vmem:[%s827 + $0x28] sm:$0xf]
        %v1849 = vld [vmem:[%s827 + $0x2c] sm:$0xf]
        %v1850 = vld [vmem:[%s827 + $0x30] sm:$0xf]
        %v1851 = vld [vmem:[%s827 + $0x34] sm:$0xf]
        %v1852 = vld [vmem:[%s827 + $0x38] sm:$0xf]
        %v1853 = vld [vmem:[%s827 + $0x3c] sm:$0xf]
        %v1854 = vld [vmem:[%s827 + $0x40] sm:$0xf]
        %v1855 = vld [vmem:[%s827 + $0x44] sm:$0xf]
        %v1856 = vld [vmem:[%s827 + $0x48] sm:$0xf]
        %v1857 = vld [vmem:[%s827 + $0x4c] sm:$0xf]
        %v1858 = vld [vmem:[%s827 + $0x50] sm:$0xf]
        %v1859 = vld [vmem:[%s827 + $0x54] sm:$0xf]
        %v1860 = vld [vmem:[%s827 + $0x58] sm:$0xf]
        %v1861 = vld [vmem:[%s827 + $0x5c] sm:$0xf]
        %v1862 = vld [vmem:[%s827 + $0x60] sm:$0xf]
        %v1863 = vld [vmem:[%s827 + $0x64] sm:$0xf]
        %v1864 = vld [vmem:[%s827 + $0x68] sm:$0xf]
        %v1865 = vld [vmem:[%s827 + $0x6c] sm:$0xf]
        %v1866 = vld [vmem:[%s827 + $0x70] sm:$0xf]
        %v1867 = vld [vmem:[%s827 + $0x74] sm:$0xf]
        %v1868 = vld [vmem:[%s827 + $0x78] sm:$0xf]
        %v1869 = vld [vmem:[%s827 + $0x7c] sm:$0xf]
        %v1870 = vpack.c.bf16 %v1836, %v1836
        %v1871 = vpack.c.bf16 %v1837, %v1837
        %v1872 = vld [vmem:[%s991] sm:$0x1]
        %v1874 = vlaneseq
        %v1875 = vshrl.u32 %v1874, 7
        %v1876 = vsub.s32 0, %v1875
        %v1877 = vrot.slane %v1872, %v1876
        %v1911 = vunpack.c.l.b16 %v1838
        %v1912 = vunpack.c.l.b16 %v1839
        %v1913 = vunpack.c.l.b16 %v1840
        %v1914 = vunpack.c.l.b16 %v1841
        %v1915 = vunpack.c.l.b16 %v1842
        %v1916 = vunpack.c.l.b16 %v1843
        %v1917 = vunpack.c.l.b16 %v1844
        %v1918 = vunpack.c.l.b16 %v1845
        %v1919 = vunpack.c.l.b16 %v1846
        %v1920 = vunpack.c.l.b16 %v1847
        %v1921 = vunpack.c.l.b16 %v1848
        %v1922 = vunpack.c.l.b16 %v1849
        %v1923 = vunpack.c.l.b16 %v1850
        %v1924 = vunpack.c.l.b16 %v1851
        %v1925 = vunpack.c.l.b16 %v1852
        %v1926 = vunpack.c.l.b16 %v1853
        %v1927 = vunpack.c.l.b16 %v1854
        %v1928 = vunpack.c.l.b16 %v1855
        %v1929 = vunpack.c.l.b16 %v1856
        %v1930 = vunpack.c.l.b16 %v1857
        %v1931 = vunpack.c.l.b16 %v1858
        %v1932 = vunpack.c.l.b16 %v1859
        %v1933 = vunpack.c.l.b16 %v1860
        %v1934 = vunpack.c.l.b16 %v1861
        %v1935 = vunpack.c.l.b16 %v1862
        %v1936 = vunpack.c.l.b16 %v1863
        %v1937 = vunpack.c.l.b16 %v1864
        %v1938 = vunpack.c.l.b16 %v1865
        %v1939 = vunpack.c.l.b16 %v1866
        %v1940 = vunpack.c.l.b16 %v1867
        %v1941 = vunpack.c.l.b16 %v1868
        %v1942 = vunpack.c.l.b16 %v1869
        %v1943 = vpack.c.b16 %v1912, %v1911
        %v1944 = vpack.c.b16 %v1914, %v1913
        %v1945 = vpack.c.b16 %v1916, %v1915
        %v1946 = vpack.c.b16 %v1918, %v1917
        %v1947 = vpack.c.b16 %v1920, %v1919
        %v1948 = vpack.c.b16 %v1922, %v1921
        %v1949 = vpack.c.b16 %v1924, %v1923
        %v1950 = vpack.c.b16 %v1926, %v1925
        %v1951 = vpack.c.b16 %v1928, %v1927
        %v1952 = vpack.c.b16 %v1930, %v1929
        %v1953 = vpack.c.b16 %v1932, %v1931
        %v1954 = vpack.c.b16 %v1934, %v1933
        %v1955 = vpack.c.b16 %v1936, %v1935
        %v1956 = vpack.c.b16 %v1938, %v1937
        %v1957 = vpack.c.b16 %v1940, %v1939
        %v1958 = vpack.c.b16 %v1942, %v1941
        %1975 = vmatprep.subr.bf16.mxu0 0
        %1976 = vmatpush1.bf16.msra.mxu0 %v1950
        %1977 = vmatprep.subr.bf16.mxu0 0
        %1978 = vmatpush1.bf16.msra.mxu0 %v1949
        %1979 = vmatprep.subr.bf16.mxu0 0
        %1980 = vmatpush1.bf16.msra.mxu0 %v1948
        %1981 = vmatprep.subr.bf16.mxu0 0
        %1982 = vmatpush1.bf16.msra.mxu0 %v1947
        %1983 = vmatprep.subr.bf16.mxu0 0
        %1984 = vmatpush1.bf16.msra.mxu0 %v1946
        %1985 = vmatprep.subr.bf16.mxu0 0
        %1986 = vmatpush1.bf16.msra.mxu0 %v1945
        %1987 = vmatprep.subr.bf16.mxu0 0
        %1988 = vmatpush1.bf16.msra.mxu0 %v1944
        %1989 = vmatprep.subr.bf16.mxu0 0
        %1990 = vmatpush1.bf16.msra.mxu0 %v1943
        %1991 = vmatprep.subr.bf16.mxu0 0
        %1992 = vmatpush2.bf16.msra.mxu0 %v1958
        %1993 = vmatprep.subr.bf16.mxu0 0
        %1994 = vmatpush2.bf16.msra.mxu0 %v1957
        %1995 = vmatprep.subr.bf16.mxu0 0
        %1996 = vmatpush2.bf16.msra.mxu0 %v1956
        %1997 = vmatprep.subr.bf16.mxu0 0
        %1998 = vmatpush2.bf16.msra.mxu0 %v1955
        %1999 = vmatprep.subr.bf16.mxu0 0
        %2000 = vmatpush2.bf16.msra.mxu0 %v1954
        %2001 = vmatprep.subr.bf16.mxu0 0
        %2002 = vmatpush2.bf16.msra.mxu0 %v1953
        %2003 = vmatprep.subr.bf16.mxu0 0
        %2004 = vmatpush2.bf16.msra.mxu0 %v1952
        %2005 = vmatprep.subr.bf16.mxu0 0
        %2006 = vmatpush2.bf16.msra.mxu0 %v1951
        %2007 = vmatprep.mubr.bf16.mxu0 %v1871
        %2008 = vmatmul.mubr.bf16.gmra.mxu0 %v1870
        %v2009 = vpop.f32.mrf.mxu0
        %v2010 = vadd.f32 %v1877, %v2009
        %v2011 = vpop.f32.mrf.mxu0
        %v2012 = vpop.f32.mrf.mxu0
        %v2013 = vpop.f32.mrf.mxu0
        %2014 = vdwg.mxu0
        %v2015 = vadd.f32 %v2010, %v1669
        %v2016 = vld [vmem:[%s835] sm:$0x1]
        %v2017 = vld [vmem:[%s843] sm:$0x1]
        %2018 = vadd.xlane.f32.xlu0 %v2015
        %v2019 = vpop.xlane.xlu0 %2018
        %v2020 = vmul.f32 %v2019, %v1646
        %v2021 = vsub.f32 %v2015, %v2020
        %v2022 = vmul.f32 %v2021, %v2021
        %2023 = vadd.xlane.f32.xlu0 %v2022
        %v2024 = vpop.xlane.xlu0 %2023
        %v2025 = vmul.f32 %v2024, %v1646
        %v2026 = vadd.f32 %v2025, 1e-05
        %v2027 = vrsqrt.pop %v2026
        %v2028 = vmul.f32 %v2021, %v2027
        %v2030 = vlaneseq
        %v2031 = vshrl.u32 %v2030, 7
        %v2032 = vsub.s32 0, %v2031
        %v2033 = vrot.slane %v2016, %v2032
        %v2035 = vmul.f32 %v2028, %v2033
        %v2037 = vlaneseq
        %v2038 = vshrl.u32 %v2037, 7
        %v2039 = vsub.s32 0, %v2038
        %v2040 = vrot.slane %v2017, %v2039
        %v2042 = vadd.f32 %v2035, %v2040
        %2043 = vst [vmem:[#allocation2] sm:$0xff] %v2042
        %p2044 = scmp.eq.s32.totalorder %s47, 1
        // Predicated region
        $region141: #{bert_classifier_forward.1} parent=99 // pred_check
          %p2045 = pneg %p2044
        $region142: #{bert_classifier_forward.1} parent=99 // pred_check_branch
          %2047 = sbr.rel (%p2045) target = $region144
        $region143: #{bert_classifier_forward.1} parent=99 // pred_region
          %v2048 = vld [vmem:[#allocation13] sm:$0xf]
          %v2049 = vld [vmem:[#allocation13 + $0x4] sm:$0xf]
          %v2050 = vld [vmem:[#allocation13 + $0x8] sm:$0xf]
          %v2051 = vld [vmem:[#allocation13 + $0xc] sm:$0xf]
          %v2052 = vld [vmem:[#allocation13 + $0x10] sm:$0xf]
          %v2053 = vld [vmem:[#allocation13 + $0x14] sm:$0xf]
          %v2054 = vld [vmem:[#allocation13 + $0x18] sm:$0xf]
          %v2055 = vld [vmem:[#allocation13 + $0x1c] sm:$0xf]
          %v2056 = vld [vmem:[#allocation13 + $0x20] sm:$0xf]
          %v2057 = vld [vmem:[#allocation13 + $0x24] sm:$0xf]
          %v2058 = vld [vmem:[#allocation13 + $0x28] sm:$0xf]
          %v2059 = vld [vmem:[#allocation13 + $0x2c] sm:$0xf]
          %v2060 = vld [vmem:[#allocation13 + $0x30] sm:$0xf]
          %v2061 = vld [vmem:[#allocation13 + $0x34] sm:$0xf]
          %v2062 = vld [vmem:[#allocation13 + $0x38] sm:$0xf]
          %v2063 = vld [vmem:[#allocation13 + $0x3c] sm:$0xf]
          %v2064 = vpack.c.bf16 %v2042, %v2042
          %v2065 = vld [vmem:[#allocation14] sm:$0x1]
          %v2082 = vunpack.c.l.b16 %v2048
          %v2083 = vunpack.c.l.b16 %v2049
          %v2084 = vunpack.c.l.b16 %v2050
          %v2085 = vunpack.c.l.b16 %v2051
          %v2086 = vunpack.c.l.b16 %v2052
          %v2087 = vunpack.c.l.b16 %v2053
          %v2088 = vunpack.c.l.b16 %v2054
          %v2089 = vunpack.c.l.b16 %v2055
          %v2090 = vunpack.c.l.b16 %v2056
          %v2091 = vunpack.c.l.b16 %v2057
          %v2092 = vunpack.c.l.b16 %v2058
          %v2093 = vunpack.c.l.b16 %v2059
          %v2094 = vunpack.c.l.b16 %v2060
          %v2095 = vunpack.c.l.b16 %v2061
          %v2096 = vunpack.c.l.b16 %v2062
          %v2097 = vunpack.c.l.b16 %v2063
          %v2098 = vpack.c.b16 %v2083, %v2082
          %v2099 = vpack.c.b16 %v2085, %v2084
          %v2100 = vpack.c.b16 %v2087, %v2086
          %v2101 = vpack.c.b16 %v2089, %v2088
          %v2102 = vpack.c.b16 %v2091, %v2090
          %v2103 = vpack.c.b16 %v2093, %v2092
          %v2104 = vpack.c.b16 %v2095, %v2094
          %v2105 = vpack.c.b16 %v2097, %v2096
          %2114 = vmatprep.subr.bf16.mxu0 0
          %2115 = vmatpush1.bf16.msra.mxu0 %v2105
          %2116 = vmatprep.subr.bf16.mxu0 0
          %2117 = vmatpush1.bf16.msra.mxu0 %v2104
          %2118 = vmatprep.subr.bf16.mxu0 0
          %2119 = vmatpush1.bf16.msra.mxu0 %v2103
          %2120 = vmatprep.subr.bf16.mxu0 0
          %2121 = vmatpush1.bf16.msra.mxu0 %v2102
          %2122 = vmatprep.subr.bf16.mxu0 0
          %2123 = vmatpush1.bf16.msra.mxu0 %v2101
          %2124 = vmatprep.subr.bf16.mxu0 0
          %2125 = vmatpush1.bf16.msra.mxu0 %v2100
          %2126 = vmatprep.subr.bf16.mxu0 0
          %2127 = vmatpush1.bf16.msra.mxu0 %v2099
          %2128 = vmatprep.subr.bf16.mxu0 0
          %2129 = vmatpush1.bf16.msra.mxu0 %v2098
          %2130 = vmatprep.subr.bf16.mxu0 0
          %2131 = vmatpush2.bf16.msra.mxu0 0
          %2132 = vmatprep.subr.bf16.mxu0 0
          %2133 = vmatpush2.bf16.msra.mxu0 0
          %2134 = vmatprep.subr.bf16.mxu0 0
          %2135 = vmatpush2.bf16.msra.mxu0 0
          %2136 = vmatprep.subr.bf16.mxu0 0
          %2137 = vmatpush2.bf16.msra.mxu0 0
          %2138 = vmatprep.subr.bf16.mxu0 0
          %2139 = vmatpush2.bf16.msra.mxu0 0
          %2140 = vmatprep.subr.bf16.mxu0 0
          %2141 = vmatpush2.bf16.msra.mxu0 0
          %2142 = vmatprep.subr.bf16.mxu0 0
          %2143 = vmatpush2.bf16.msra.mxu0 0
          %2144 = vmatprep.subr.bf16.mxu0 0
          %2145 = vmatpush2.bf16.msra.mxu0 0
          %2146 = vmatprep.mubr.bf16.mxu0 0
          %2147 = vmatmul.mubr.bf16.gmra.mxu0 %v2064
          %v2148 = vpop.f32.mrf.mxu0
          %v2149 = vadd.f32 %v2065, %v2148
          %v2150 = vpop.f32.mrf.mxu0
          %v2151 = vpop.f32.mrf.mxu0
          %v2152 = vpop.f32.mrf.mxu0
          %2153 = vdwg.mxu0
          %v2154 = vtanh.pop %v2149
          %v2155 = vld [vmem:[#allocation16] sm:$0xf]
          %v2156 = vld [vmem:[#allocation16 + $0x4] sm:$0xf]
          %v2157 = vld [vmem:[#allocation16 + $0x8] sm:$0xf]
          %v2158 = vld [vmem:[#allocation16 + $0xc] sm:$0xf]
          %v2159 = vld [vmem:[#allocation16 + $0x10] sm:$0xf]
          %v2160 = vld [vmem:[#allocation16 + $0x14] sm:$0xf]
          %v2161 = vld [vmem:[#allocation16 + $0x18] sm:$0xf]
          %v2162 = vld [vmem:[#allocation16 + $0x1c] sm:$0xf]
          %v2163 = vld [vmem:[#allocation16 + $0x20] sm:$0xf]
          %v2164 = vld [vmem:[#allocation16 + $0x24] sm:$0xf]
          %v2165 = vld [vmem:[#allocation16 + $0x28] sm:$0xf]
          %v2166 = vld [vmem:[#allocation16 + $0x2c] sm:$0xf]
          %v2167 = vld [vmem:[#allocation16 + $0x30] sm:$0xf]
          %v2168 = vld [vmem:[#allocation16 + $0x34] sm:$0xf]
          %v2169 = vld [vmem:[#allocation16 + $0x38] sm:$0xf]
          %v2170 = vld [vmem:[#allocation16 + $0x3c] sm:$0xf]
          %v2171 = vpack.c.bf16 %v2154, %v2154
          %v2172 = vld [vmem:[%s19] sm:$0x1]
          %v2189 = vunpack.c.l.b16 %v2155
          %v2190 = vunpack.c.l.b16 %v2156
          %v2191 = vunpack.c.l.b16 %v2157
          %v2192 = vunpack.c.l.b16 %v2158
          %v2193 = vunpack.c.l.b16 %v2159
          %v2194 = vunpack.c.l.b16 %v2160
          %v2195 = vunpack.c.l.b16 %v2161
          %v2196 = vunpack.c.l.b16 %v2162
          %v2197 = vunpack.c.l.b16 %v2163
          %v2198 = vunpack.c.l.b16 %v2164
          %v2199 = vunpack.c.l.b16 %v2165
          %v2200 = vunpack.c.l.b16 %v2166
          %v2201 = vunpack.c.l.b16 %v2167
          %v2202 = vunpack.c.l.b16 %v2168
          %v2203 = vunpack.c.l.b16 %v2169
          %v2204 = vunpack.c.l.b16 %v2170
          %v2205 = vpack.c.b16 %v2190, %v2189
          %v2206 = vpack.c.b16 %v2192, %v2191
          %v2207 = vpack.c.b16 %v2194, %v2193
          %v2208 = vpack.c.b16 %v2196, %v2195
          %v2209 = vpack.c.b16 %v2198, %v2197
          %v2210 = vpack.c.b16 %v2200, %v2199
          %v2211 = vpack.c.b16 %v2202, %v2201
          %v2212 = vpack.c.b16 %v2204, %v2203
          %2221 = vmatprep.subr.bf16.mxu0 0
          %2222 = vmatpush1.bf16.msra.mxu0 %v2212
          %2223 = vmatprep.subr.bf16.mxu0 0
          %2224 = vmatpush1.bf16.msra.mxu0 %v2211
          %2225 = vmatprep.subr.bf16.mxu0 0
          %2226 = vmatpush1.bf16.msra.mxu0 %v2210
          %2227 = vmatprep.subr.bf16.mxu0 0
          %2228 = vmatpush1.bf16.msra.mxu0 %v2209
          %2229 = vmatprep.subr.bf16.mxu0 0
          %2230 = vmatpush1.bf16.msra.mxu0 %v2208
          %2231 = vmatprep.subr.bf16.mxu0 0
          %2232 = vmatpush1.bf16.msra.mxu0 %v2207
          %2233 = vmatprep.subr.bf16.mxu0 0
          %2234 = vmatpush1.bf16.msra.mxu0 %v2206
          %2235 = vmatprep.subr.bf16.mxu0 0
          %2236 = vmatpush1.bf16.msra.mxu0 %v2205
          %2237 = vmatprep.subr.bf16.mxu0 0
          %2238 = vmatpush2.bf16.msra.mxu0 0
          %2239 = vmatprep.subr.bf16.mxu0 0
          %2240 = vmatpush2.bf16.msra.mxu0 0
          %2241 = vmatprep.subr.bf16.mxu0 0
          %2242 = vmatpush2.bf16.msra.mxu0 0
          %2243 = vmatprep.subr.bf16.mxu0 0
          %2244 = vmatpush2.bf16.msra.mxu0 0
          %2245 = vmatprep.subr.bf16.mxu0 0
          %2246 = vmatpush2.bf16.msra.mxu0 0
          %2247 = vmatprep.subr.bf16.mxu0 0
          %2248 = vmatpush2.bf16.msra.mxu0 0
          %2249 = vmatprep.subr.bf16.mxu0 0
          %2250 = vmatpush2.bf16.msra.mxu0 0
          %2251 = vmatprep.subr.bf16.mxu0 0
          %2252 = vmatpush2.bf16.msra.mxu0 0
          %2253 = vmatprep.mubr.bf16.mxu0 0
          %2254 = vmatmul.mubr.bf16.gmra.mxu0 %v2171
          %v2255 = vpop.f32.mrf.mxu0
          %v2256 = vadd.f32 %v2172, %v2255
          %v2257 = vpop.f32.mrf.mxu0
          %v2258 = vpop.f32.mrf.mxu0
          %v2259 = vpop.f32.mrf.mxu0
          %2260 = vdwg.mxu0
          %2261 = vst [vmem:[%s994] sm:$0x1] %v2256
        $region144: #{bert_classifier_forward.1} parent=99 // pred_fallthru
          _
        %p2262 = scmp.lt.s32.totalorder %s46, 1
        %s2263 = scalar_select %p2262, %s46, 1
        %s2264 = scalar_lea.vmem %s20, %s2263
        // Predicated region
        $region145: #{bert_classifier_forward.1} parent=99 // pred_check
          %p2265 = pneg %p562
        $region146: #{bert_classifier_forward.1} parent=99 // pred_check_branch
          %2267 = sbr.rel (%p2265) target = $region148
        $region147: #{bert_classifier_forward.1} parent=99 // pred_region
          _
        $region148: #{bert_classifier_forward.1} parent=99 // pred_fallthru
          _
      $region100: #{bert_classifier_forward.1} parent=5 // pred_fallthru
        _
      %p2268 = scmp.le.s32.totalorder 2, %s37
      // Predicated region
      $region149: #{bert_classifier_forward.1} parent=5 // pred_check
        %p2269 = pneg %p2268
      $region150: #{bert_classifier_forward.1} parent=5 // pred_check_branch
        %2271 = sbr.rel (%p2269) target = $region152
      $region151: #{bert_classifier_forward.1} parent=5 // pred_region
        %s2272 = ssub.s32 %s37, 2
        // Predicated region
        $region153: #{bert_classifier_forward.1} parent=151 // pred_check
          %p2273 = pneg %p568
        $region154: #{bert_classifier_forward.1} parent=151 // pred_check_branch
          %2275 = sbr.rel (%p2273) target = $region156
        $region155: #{bert_classifier_forward.1} parent=151 // pred_region
          %p2276 = scmp.lt.s32.totalorder %s48, 1
          %s2277 = scalar_select %p2276, %s48, 1
          %s2278 = scalar_lea.vmem %s20, %s2277
        $region156: #{bert_classifier_forward.1} parent=151 // pred_fallthru
          _
      $region152: #{bert_classifier_forward.1} parent=5 // pred_fallthru
        _
    $region6: #{bert_classifier_forward.1} parent=1 // loop_footer
      %s41 = sadd.s32 1, %s37
    $region7: #{bert_classifier_forward.1} parent=1 // loop_footer_branch
      %36 = sbr.rel target = $region3
    $region8: #{bert_classifier_forward.1} parent=1 // loop_exit
      _
    %2279 = vsyncpa [#allocation4], 1
    %s2280 = scalar_lea.sflag [#allocation4], 1
    %2281 = vsyncpa %s2280, 1
    %2282 = vsyncpa [#allocation6], 1
    %s2283 = scalar_lea.sflag [#allocation6], 1
    %2284 = vsyncpa %s2283, 1
    %2285 = vsyncpa [#allocation9], 1
    %s2286 = scalar_lea.sflag [#allocation9], 1
    %2287 = vsyncpa %s2286, 1
    %2288 = vsyncpa [#allocation12], 1
    %s2289 = scalar_lea.sflag [#allocation12], 1
    %2290 = vsyncpa %s2289, 1
    %2291 = vsyncpa [#allocation15], 1

</llo_original>
